<compile_context>
chip_gen: v6e
topology: v6e:2x2x1
jax: 0.10.0
libtpu: 0.0.40
codegen_flags: <defaults>
</compile_context>

<pallas_src>
import numpy as np
import jax
import jax.numpy as jnp
from jax.experimental import pallas as pl
from jax.experimental.pallas import tpu as pltpu

HIDDEN = 512     # nn.LSTM(hidden_size=512)
FEATURES = 2048  # nn.LSTM(input_size=2048) == base-model feature width


def _round_up(x, m):
    return ((x + m - 1) // m) * m


# ---------------------------------------------------------------------------
# Generation-aware VMEM limit (v5e/v6e: 128 MiB, v7x: 64 MiB per TensorCore)
# ---------------------------------------------------------------------------
_VMEM_LIMIT_CACHE = [None]


def _get_vmem_limit():
    if _VMEM_LIMIT_CACHE[0] is None:
        cap = None
        try:
            info = pltpu.get_tpu_info()
            cap = getattr(info, "vmem_capacity_bytes", None)
        except Exception:
            cap = None
        if not cap:
            cap = 64 * 1024 * 1024          # conservative (v7x physical)
        _VMEM_LIMIT_CACHE[0] = int(min(cap * 3 // 4, 100 * 1024 * 1024))
    return _VMEM_LIMIT_CACHE[0]


# ---------------------------------------------------------------------------
# Pallas kernel 1: tiled matmul + bias  (out = x @ w_t + b)
# grid = (Mp//tm, Np//tn, Kp//tk); f32 accumulator scratch per (i, j) tile.
# ---------------------------------------------------------------------------
def _mm_bias_kernel(x_ref, w_ref, b_ref, o_ref, acc_ref):
    @pl.when(pl.program_id(2) == 0)
    def _():
        acc_ref[...] = jnp.zeros_like(acc_ref)

    acc_ref[...] += jnp.dot(x_ref[...], w_ref[...],
                            preferred_element_type=jnp.float32)

    @pl.when(pl.program_id(2) == pl.num_programs(2) - 1)
    def _():
        o_ref[...] = (acc_ref[...] + b_ref[...]).astype(o_ref.dtype)


def matmul_bias(x, w_t, bias, out_dtype=jnp.float32):
    """out = x @ w_t + bias, tiled over (M, N, K) with f32 accumulation."""
    M, K = x.shape
    K2, N = w_t.shape
    assert K == K2 and bias.shape == (1, N)
    xb = jnp.dtype(x.dtype).itemsize
    wb = jnp.dtype(w_t.dtype).itemsize
    ob = jnp.dtype(out_dtype).itemsize

    vmem = _get_vmem_limit()
    budget = vmem - (8 << 20)                 # headroom for control/pipeline

    # Big tiles first (tm<=512, tn<=1024); shrink until double-buffered
    # working set (+ f32 accumulator) fits the per-chip VMEM budget.
    tm = min(512, _round_up(M, 8))
    tn = min(1024, _round_up(N, 128))
    tk = K if K <= 512 else 512               # small K -> single full-K block

    def step_bytes(tm_, tn_, tk_):
        return (2 * (tm_ * tk_ * xb + tk_ * tn_ * wb + tm_ * tn_ * ob
                     + tn_ * 4) + tm_ * tn_ * 4)

    while step_bytes(tm, tn, tk) > budget:
        if tn > 256:
            tn //= 2
        elif tm > 64:
            tm //= 2
        elif tk > 128:
            tk //= 2
        else:
            break

    # cdiv-style grid: pad operands in the wrapper, slice the result.
    Mp, Np, Kp = _round_up(M, tm), _round_up(N, tn), _round_up(K, tk)
    if (Mp, Kp) != (M, K):
        x = jnp.pad(x, ((0, Mp - M), (0, Kp - K)))
    if (Kp, Np) != (K, N):
        w_t = jnp.pad(w_t, ((0, Kp - K), (0, Np - N)))
    if Np != N:
        bias = jnp.pad(bias, ((0, 0), (0, Np - N)))

    grid = (Mp // tm, Np // tn, Kp // tk)
    cost = pl.CostEstimate(
        flops=2 * M * N * K, transcendentals=0,
        bytes_accessed=M * K * xb + K * N * wb + M * N * ob)

    out = pl.pallas_call(
        _mm_bias_kernel,
        out_shape=jax.ShapeDtypeStruct((Mp, Np), out_dtype),
        grid_spec=pltpu.PrefetchScalarGridSpec(
            num_scalar_prefetch=0,
            grid=grid,
            in_specs=[pl.BlockSpec((tm, tk), lambda i, j, k: (i, k)),
                      pl.BlockSpec((tk, tn), lambda i, j, k: (k, j)),
                      pl.BlockSpec((1, tn), lambda i, j, k: (0, j))],
            out_specs=pl.BlockSpec((tm, tn), lambda i, j, k: (i, j)),
            scratch_shapes=[pltpu.VMEM((tm, tn), jnp.float32)]),
        compiler_params=pltpu.CompilerParams(
            dimension_semantics=("parallel", "parallel", "arbitrary"),
            vmem_limit_bytes=vmem),
        cost_estimate=cost,
    )(x, w_t, bias)

    if (Mp, Np) != (M, N):
        out = out[:M, :N]
    return out


# ---------------------------------------------------------------------------
# Pallas kernel 2: fused input-projection + masked LSTM recurrence + final FC.
# grid = (B_pad // tb, T_pad // TCHUNK), dimension_semantics=("parallel",
# "arbitrary").  W_ih / W_hh stay resident in VMEM; per chunk the gates are
# computed with one (tchunk*tb, F) @ (F, 4H) matmul into VMEM scratch, then
# the recurrence runs fully unrolled with static indices.  h/c live in VMEM
# scratch across chunks (accumulator pattern); fc(h_last) is emitted at the
# last time-chunk for each batch block.
# ---------------------------------------------------------------------------
def _lstm_fused_kernel(feats_ref, lens_ref, h0_ref, c0_ref, wih_ref, bg_ref,
                       whh_ref, fcw_ref, fcb_ref, o_ref,
                       gx_scr, h_scr, c_scr):
    tc = pl.program_id(1)
    tchunk, tb, feat = feats_ref.shape
    hd = h_scr.shape[1]

    @pl.when(tc == 0)
    def _():
        h_scr[...] = h0_ref[...]
        c_scr[...] = c0_ref[...]

    # ---- fused input projection for the whole chunk (MXU, bf16 x bf16) -----
    feats2d = feats_ref[...].reshape(tchunk * tb, feat)            # bf16
    gx = jnp.dot(feats2d, wih_ref[...], preferred_element_type=jnp.float32)
    gx_scr[...] = gx + bg_ref[...]                                 # f32 gates_x

    lens = lens_ref[...]                  # (tb, 1) int32
    whh = whh_ref[...]                    # (Hd, 4Hd) bf16, hoisted
    t0 = tc * tchunk

    def sigm(x):
        # sigmoid via tanh: one EUP push instead of exp + reciprocal
        return 0.5 * jnp.tanh(0.5 * x) + 0.5

    h = h_scr[...]
    c = c_scr[...]
    for tl in range(tchunk):              # fully unrolled, static indices
        gates = (gx_scr[pl.ds(tl * tb, tb), :]
                 + jnp.dot(h.astype(whh.dtype), whh,
                           preferred_element_type=jnp.float32))
        i_g = sigm(gates[:, 0:hd])
        f_g = sigm(gates[:, hd:2 * hd])
        g_g = jnp.tanh(gates[:, 2 * hd:3 * hd])
        o_g = sigm(gates[:, 3 * hd:4 * hd])
        c_new = f_g * c + i_g * g_g
        h_new = o_g * jnp.tanh(c_new)
        # packed-sequence semantics: rows with t >= lens[b] keep their state
        valid = (t0 + tl) < lens
        h = jnp.where(valid, h_new, h)
        c = jnp.where(valid, c_new, c)
    h_scr[...] = h
    c_scr[...] = c

    @pl.when(tc == pl.num_programs(1) - 1)
    def _():
        o_ref[...] = (jnp.dot(h, fcw_ref[...],
                              preferred_element_type=jnp.float32)
                      + fcb_ref[...]).astype(o_ref.dtype)


def lstm_fused_fc(feats, lens2d, h0, c0, w_ih_t, b_gates, w_hh_t,
                  fc_w_t, fc_b, tchunk):
    Tp, Bp, F = feats.shape
    Hd = h0.shape[1]
    G = w_ih_t.shape[1]
    Cp = fc_w_t.shape[1]
    assert Tp % tchunk == 0 and Bp % 8 == 0

    # Batch-block the recurrence: on v7x the two TensorCores each take half
    # the batch (only meaningful when B_pad >= 16; otherwise single block).
    if Bp >= 16 and (Bp // 2) % 8 == 0:
        tb = Bp // 2
    elif Bp >= 16:
        tb = 8
    else:
        tb = Bp
    grid = (Bp // tb, Tp // tchunk)

    def build(single_buffer):
        def spec(shape, imap, invariant=False):
            # Loop-invariant operands (constant index over the inner axis):
            # request single-buffering to save VMEM; fall back if unsupported.
            if invariant and single_buffer and hasattr(pl, "Buffered"):
                try:
                    return pl.BlockSpec(shape, imap,
                                        pipeline_mode=pl.Buffered(1))
                except TypeError:
                    return pl.BlockSpec(shape, imap)
            return pl.BlockSpec(shape, imap)

        return pl.pallas_call(
            _lstm_fused_kernel,
            out_shape=jax.ShapeDtypeStruct((Bp, Cp), jnp.float32),
            grid_spec=pltpu.PrefetchScalarGridSpec(
                num_scalar_prefetch=0,
                grid=grid,
                in_specs=[
                    spec((tchunk, tb, F), lambda bb, tc: (tc, bb, 0)),
                    spec((tb, 1), lambda bb, tc: (bb, 0), invariant=True),
                    spec((tb, Hd), lambda bb, tc: (bb, 0), invariant=True),
                    spec((tb, Hd), lambda bb, tc: (bb, 0), invariant=True),
                    spec((F, G), lambda bb, tc: (0, 0), invariant=True),
                    spec((1, G), lambda bb, tc: (0, 0), invariant=True),
                    spec((Hd, G), lambda bb, tc: (0, 0), invariant=True),
                    spec((Hd, Cp), lambda bb, tc: (0, 0), invariant=True),
                    spec((1, Cp), lambda bb, tc: (0, 0), invariant=True),
                ],
                out_specs=pl.BlockSpec((tb, Cp), lambda bb, tc: (bb, 0)),
                scratch_shapes=[pltpu.VMEM((tchunk * tb, G), jnp.float32),
                                pltpu.VMEM((tb, Hd), jnp.float32),
                                pltpu.VMEM((tb, Hd), jnp.float32)]),
            compiler_params=pltpu.CompilerParams(
                dimension_semantics=("parallel", "arbitrary"),
                vmem_limit_bytes=_get_vmem_limit()),
        )

    args = (feats, lens2d, h0, c0, w_ih_t, b_gates, w_hh_t, fc_w_t, fc_b)
    try:
        return build(True)(*args)
    except Exception:
        # Fall back to default double-buffering if pipeline_mode=Buffered(1)
        # is rejected by the installed Pallas version.
        return build(False)(*args)


# ---------------------------------------------------------------------------
# Full forward (glue in plain JAX, hot paths in Pallas)
# ---------------------------------------------------------------------------
def nviewnet_rnn_forward(params, image_series, lens, h0, c0):
    B, T, C, H, W = image_series.shape
    NC = params["fc_b_vec"].shape[0]
    B_pad = _round_up(B, 8)
    TCHUNK = min(16, _round_up(T, 8))
    T_pad = _round_up(T, TCHUNK)

    # --- base model stand-in: GAP over spatial dims, bf16 linear C -> 2048 ---
    # TODO(synk): replace with the real pretrained CNN trunk features.
    pooled = jnp.mean(image_series, axis=(3, 4))                    # (B, T, C)
    pooled = jnp.pad(pooled, ((0, B_pad - B), (0, T_pad - T), (0, 0)))
    # time-major rows so the LSTM kernel indexes feats without any transpose
    pooled_tm = jnp.transpose(pooled, (1, 0, 2)).reshape(T_pad * B_pad, C)
    zero_bias = jnp.zeros((1, FEATURES), jnp.float32)
    feats = matmul_bias(pooled_tm.astype(jnp.bfloat16), params["w_base_t"],
                        zero_bias, out_dtype=jnp.bfloat16)          # (T*B, 2048)
    feats = feats.reshape(T_pad, B_pad, FEATURES)

    lens_p = jnp.pad(lens.astype(jnp.int32), (0, B_pad - B)).reshape(B_pad, 1)
    h0_p = jnp.pad(h0, ((0, B_pad - B), (0, 0)))
    c0_p = jnp.pad(c0, ((0, B_pad - B), (0, 0)))

    # pad fc output dim to a lane-dense multiple of 128 (unmasked stores)
    C_pad = _round_up(NC, 128)
    fc_w_t = jnp.pad(params["fc_w_t"], ((0, 0), (0, C_pad - NC)))
    fc_b = jnp.pad(params["fc_b"], ((0, 0), (0, C_pad - NC)))

    out = lstm_fused_fc(feats, lens_p, h0_p, c0_p, params["w_ih_t"],
                        params["b_gates"], params["w_hh_t"], fc_w_t, fc_b,
                        TCHUNK)
    return out[:B, :NC]


# ---------------------------------------------------------------------------
# Deterministic parameter init (matching the module's shapes)
# ---------------------------------------------------------------------------
def init_params(key, in_channels, num_classes):
    ks = jax.random.split(key, 7)
    lim = 1.0 / np.sqrt(HIDDEN)

    def u(k, shape, l):
        return jax.random.uniform(k, shape, jnp.float32, -l, l)

    w_base = u(ks[0], (FEATURES, in_channels), 0.5)
    w_ih = u(ks[1], (4 * HIDDEN, FEATURES), lim)   # LSTM weight_ih_l0
    w_hh = u(ks[2], (4 * HIDDEN, HIDDEN), lim)     # LSTM weight_hh_l0
    b_ih = u(ks[3], (4 * HIDDEN,), lim)
    b_hh = u(ks[4], (4 * HIDDEN,), lim)
    fc_w = u(ks[5], (num_classes, HIDDEN), lim)    # nn.Linear(512, num_classes)
    fc_b = u(ks[6], (num_classes,), lim)
    return dict(
        # transposed / packed views used by the kernels (bf16 MXU weights)
        w_base_t=jnp.asarray(w_base.T).astype(jnp.bfloat16),
        w_ih_t=jnp.asarray(w_ih.T).astype(jnp.bfloat16),
        w_hh_t=jnp.asarray(w_hh.T).astype(jnp.bfloat16),
        b_gates=(b_ih + b_hh).reshape(1, 4 * HIDDEN),
        fc_w_t=jnp.asarray(fc_w.T),
        fc_b=fc_b.reshape(1, num_classes),
        # plain copies for the pure-JAX reference
        w_base=w_base, w_ih=w_ih, w_hh=w_hh, b_ih=b_ih, b_hh=b_hh,
        fc_w=fc_w, fc_b_vec=fc_b)


# ---------------------------------------------------------------------------
# Pure-JAX reference (mirrors PyTorch packed-LSTM semantics, f32 HIGHEST)
# ---------------------------------------------------------------------------
def reference_forward(params, image_series, lens, h0, c0):
    B, T, C, H, W = image_series.shape
    hp = jax.lax.Precision.HIGHEST
    frames = image_series.reshape(B * T, C, H, W)
    pooled = jnp.mean(frames, axis=(2, 3))
    feats = jnp.dot(pooled, params["w_base"].T, precision=hp)
    feats = feats.reshape(B, T, FEATURES)
    h, c = h0, c0
    for t in range(T):
        x_t = feats[:, t]
        gates = (jnp.dot(x_t, params["w_ih"].T, precision=hp) + params["b_ih"]
                 + jnp.dot(h, params["w_hh"].T, precision=hp) + params["b_hh"])
        i_g = jax.nn.sigmoid(gates[:, :HIDDEN])
        f_g = jax.nn.sigmoid(gates[:, HIDDEN:2 * HIDDEN])
        g_g = jnp.tanh(gates[:, 2 * HIDDEN:3 * HIDDEN])
        o_g = jax.nn.sigmoid(gates[:, 3 * HIDDEN:])
        c_new = f_g * c + i_g * g_g
        h_new = o_g * jnp.tanh(c_new)
        mask = (t < lens)[:, None]
        h = jnp.where(mask, h_new, h)
        c = jnp.where(mask, c_new, c)
    return jnp.dot(h, params["fc_w"].T, precision=hp) + params["fc_b_vec"]


if __name__ == "__main__":
    B, T, C, H, W = 2, 5, 4, 16, 16
    NUM_CLASSES = 10

    key = jax.random.PRNGKey(0)
    k_img, k_par, k_h0, k_c0 = jax.random.split(key, 4)

    image_series = jax.random.normal(k_img, (B, T, C, H, W), jnp.float32)
    lens = jnp.array([5, 3], dtype=jnp.int32)          # variable view counts
    params = init_params(k_par, C, NUM_CLASSES)
    # hidden_init = torch.randn(1, B, 512) -> here deterministic jax.random
    h0 = jax.random.normal(k_h0, (B, HIDDEN), jnp.float32)
    c0 = jax.random.normal(k_c0, (B, HIDDEN), jnp.float32)

    out = nviewnet_rnn_forward(params, image_series, lens, h0, c0)
    out = jax.block_until_ready(out)
    assert out.shape == (B, NUM_CLASSES) and out.dtype == jnp.float32

    ref = reference_forward(params, image_series, lens, h0, c0)
    np.testing.assert_allclose(np.asarray(out), np.asarray(ref),
                               atol=5e-2, rtol=5e-2)
    print("KERNEL_OK")
</pallas_src>

<mosaic_0001>
module attributes {stable_mosaic.version = 11 : i64} {
  func.func @_mm_bias_kernel(%arg0: i32, %arg1: i32, %arg2: i32, %arg3: memref<64x4xbf16, #tpu.memory_space<vmem>>, %arg4: memref<4x1024xbf16, #tpu.memory_space<vmem>>, %arg5: memref<1x1024xf32, #tpu.memory_space<vmem>>, %arg6: memref<64x1024xbf16, #tpu.memory_space<vmem>>, %arg7: memref<64x1024xf32, #tpu.memory_space<vmem>>) attributes {dimension_semantics = [#tpu.dimension_semantics<parallel>, #tpu.dimension_semantics<parallel>, #tpu.dimension_semantics<arbitrary>], iteration_bounds = array<i64: 1, 2, 1>, scalar_prefetch = 0 : i64, scratch_operands = 1 : i64, tpu.core_type = #tpu.core_type<tc>, window_params = [{transform_indices = @transform_0, window_bounds = array<i64: 64, 4>}, {transform_indices = @transform_1, window_bounds = array<i64: 4, 1024>}, {transform_indices = @transform_2, window_bounds = array<i64: 1, 1024>}, {transform_indices = @transform_3, window_bounds = array<i64: 64, 1024>}]} {
    %c0_i32 = arith.constant 0 : i32
    %0 = arith.cmpi eq, %arg2, %c0_i32 : i32
    %1 = arith.extui %0 : i1 to i32
    %c0_i32_0 = arith.constant 0 : i32
    %2 = arith.cmpi ne, %1, %c0_i32_0 : i32
    scf.if %2 {
      %cst_10 = arith.constant 0.000000e+00 : f32
      %12 = vector.broadcast %cst_10 : f32 to vector<64x1024xf32>
      %c0_11 = arith.constant 0 : index
      %c0_12 = arith.constant 0 : index
      %13 = vector.load %arg7[%c0_11, %c0_12] : memref<64x1024xf32, #tpu.memory_space<vmem>>, vector<64x1024xf32>
      tpu.vector_store %arg7[%c0_11, %c0_12], %12 {strides = array<i32>} : memref<64x1024xf32, #tpu.memory_space<vmem>>, vector<64x1024xf32>,
    } else {
    }
    %c0 = arith.constant 0 : index
    %c0_1 = arith.constant 0 : index
    %3 = vector.load %arg7[%c0, %c0_1] : memref<64x1024xf32, #tpu.memory_space<vmem>>, vector<64x1024xf32>
    %c0_2 = arith.constant 0 : index
    %c0_3 = arith.constant 0 : index
    %4 = vector.load %arg3[%c0_2, %c0_3] : memref<64x4xbf16, #tpu.memory_space<vmem>>, vector<64x4xbf16>
    %c0_4 = arith.constant 0 : index
    %c0_5 = arith.constant 0 : index
    %5 = vector.load %arg4[%c0_4, %c0_5] : memref<4x1024xbf16, #tpu.memory_space<vmem>>, vector<4x1024xbf16>
    %cst = arith.constant dense<0.000000e+00> : vector<64x1024xf32>
    %6 = tpu.matmul %4, %5, %cst {dimension_numbers = #tpu.dot_dimension_numbers<[1], [0], [0], [1], [0, 0, 1, 1], [], []>} : vector<64x4xbf16>, vector<4x1024xbf16>, vector<64x1024xf32> -> vector<64x1024xf32>
    %7 = arith.addf %3, %6 : vector<64x1024xf32>
    %c0_6 = arith.constant 0 : index
    %c0_7 = arith.constant 0 : index
    %8 = vector.load %arg7[%c0_6, %c0_7] : memref<64x1024xf32, #tpu.memory_space<vmem>>, vector<64x1024xf32>
    tpu.vector_store %arg7[%c0_6, %c0_7], %7 {strides = array<i32>} : memref<64x1024xf32, #tpu.memory_space<vmem>>, vector<64x1024xf32>,
    %c0_i32_8 = arith.constant 0 : i32
    %9 = arith.cmpi eq, %arg2, %c0_i32_8 : i32
    %10 = arith.extui %9 : i1 to i32
    %c0_i32_9 = arith.constant 0 : i32
    %11 = arith.cmpi ne, %10, %c0_i32_9 : i32
    scf.if %11 {
      %c0_10 = arith.constant 0 : index
      %c0_11 = arith.constant 0 : index
      %12 = vector.load %arg7[%c0_10, %c0_11] : memref<64x1024xf32, #tpu.memory_space<vmem>>, vector<64x1024xf32>
      %c0_12 = arith.constant 0 : index
      %c0_13 = arith.constant 0 : index
      %13 = vector.load %arg5[%c0_12, %c0_13] : memref<1x1024xf32, #tpu.memory_space<vmem>>, vector<1x1024xf32>
      %14 = vector.broadcast %13 : vector<1x1024xf32> to vector<64x1024xf32>
      %15 = arith.addf %12, %14 : vector<64x1024xf32>
      %16 = arith.truncf %15 : vector<64x1024xf32> to vector<64x1024xbf16>
      %c0_14 = arith.constant 0 : index
      %c0_15 = arith.constant 0 : index
      %17 = vector.load %arg6[%c0_14, %c0_15] : memref<64x1024xbf16, #tpu.memory_space<vmem>>, vector<64x1024xbf16>
      tpu.vector_store %arg6[%c0_14, %c0_15], %16 {strides = array<i32>} : memref<64x1024xbf16, #tpu.memory_space<vmem>>, vector<64x1024xbf16>,
    } else {
    }
    return
  }
  func.func @transform_0(%arg0: i32, %arg1: i32, %arg2: i32) -> (i32, i32) {
    %c0_i32 = arith.constant 0 : i32
    return %arg0, %arg2 : i32, i32
  }
  func.func @transform_1(%arg0: i32, %arg1: i32, %arg2: i32) -> (i32, i32) {
    %c0_i32 = arith.constant 0 : i32
    return %arg2, %arg1 : i32, i32
  }
  func.func @transform_2(%arg0: i32, %arg1: i32, %arg2: i32) -> (i32, i32) {
    %c0_i32 = arith.constant 0 : i32
    %c0_i32_0 = arith.constant 0 : i32
    return %c0_i32, %arg1 : i32, i32
  }
  func.func @transform_3(%arg0: i32, %arg1: i32, %arg2: i32) -> (i32, i32) {
    %c0_i32 = arith.constant 0 : i32
    return %arg0, %arg1 : i32, i32
  }
}

</mosaic_0001>

<llo_original>
// kernel: tpu_custom_call.1
$region0: #{tpu_custom_call.1}
  #allocation0 [shape = 'u32[]', space=smem, size = 0x4, offset = 0x4, fixed_abs, tag = 'smem constant byte address 0x4 - core index']
  #allocation1 [shape = 'u32[144,128]{1,0:T(1,128)}', space=vmem, size = 0x12000, scoped, tag = 'internal scratch']
  #allocation2 [shape = 'f32[64,1024]{1,0:T(8,128)}', space=vmem, size = 0x40000, scoped, tag = 'scratch operand']
  %s0 = inlined_call_operand.vmem [shape: bf16[64,4], index: 0, kind: input, shape index: {}]
  %s1 = inlined_call_operand.vmem [shape: bf16[4,2048], index: 1, kind: input, shape index: {}]
  %s2 = inlined_call_operand.hbm [shape: f32[1,2048], index: 2, kind: input, shape index: {}]
  %s3 = inlined_call_operand.hbm [shape: bf16[64,2048], index: 3, kind: output, shape index: {}]
  %s4 = sld [smem:[#allocation0]]
  $region57: #{tpu_custom_call.1} parent=0
    _
  %s6 = ssub.s32 1, %s4
  %s7 = scalar_select 0, %s6, %s4
  $region1: #{tpu_custom_call.1} parent=0
    #allocation3 [shape = 'u8[8192]{0}', space=vmem, size = 0x2000, scoped, tag = 'input window, operand 2']
    #allocation4 [shape = 's32[2]{0}', space=sflag, size = 0x8, scoped, tag = 'scoped memory for tpu_custom_call.1']
    #allocation5 [shape = 's32[2]{0}', space=sflag, size = 0x8, scoped, tag = 'scoped memory for tpu_custom_call.1']
    #allocation6 [shape = 'u8[262144]{0}', space=vmem, size = 0x40000, scoped, tag = 'output window, operand 0']
    %8 = vsyncpa [#allocation4], 0
    %s9 = scalar_lea.sflag [#allocation4], 1
    %10 = vsyncpa %s9, 0
    %11 = vsyncpa [#allocation5], 0
    %s12 = scalar_lea.sflag [#allocation5], 1
    %13 = vsyncpa %s12, 0
    loop: start=0, step=1, limit=4
    $region2: #{tpu_custom_call.1} parent=1 // loop_pre_header
      _
    $region3: #{tpu_custom_call.1} parent=1 // loop_header
      %s15 = sphi 0, %s19
      %p16 = scmp.ge.s32.totalorder %s15, 4
      %s22 = sphi 0, %s41
      %s23 = sphi 0, %s37
      %s24 = sphi 0, %s33
      %s25 = sphi 0, %s22
      %s26 = sphi 0, %s23
      %s27 = sphi 0, %s24
      %s28 = sphi 0, %s25
      %s29 = sphi 0, %s26
      %s30 = sphi 0, %s27
      %s46 = sphi 0, %s48
      %s49 = sphi 0, %s46
      %s50 = sphi 0, %s49
      %s66 = sphi 0, %s50
      %s74 = sphi 0, %s76
      %s77 = sphi 0, %s74
      %s78 = sphi 0, %s77
      %s94 = sphi 0, %s78
      %s100 = sphi 0, %s102
      %s103 = sphi 0, %s100
      %s104 = sphi 0, %s103
      %s120 = sphi 0, %s104
      %s128 = sphi 0, %s130
      %s131 = sphi 0, %s128
      %s132 = sphi 0, %s131
      %s148 = sphi 0, %s132
    $region4: #{tpu_custom_call.1} parent=1 // loop_header_branch
      %18 = sbr.rel (%p16) target = $region8
    $region5: #{tpu_custom_call.1} parent=1 // loop_body
      %s20 = ssub.s32 %s15, 1
      %s21 = ssub.s32 %s15, 2
      %s31 = sadd.s32 1, %s24
      %p32 = scmp.ge.s32.totalorder %s31, 1
      %s33 = scalar_select %p32, 0, %s31
      %s34 = sadd.s32 1, %s23
      %s35 = scalar_select %p32, %s34, %s23
      %p36 = scmp.ge.s32.totalorder %s35, 2
      %s37 = scalar_select %p36, 0, %s35
      %s38 = sadd.s32 1, %s22
      %s39 = scalar_select %p36, %s38, %s22
      %p40 = scmp.ge.s32.totalorder %s39, 1
      %s41 = scalar_select %p40, 0, %s39
      %s42 = ssub.s32 %s22, %s41
      %s43 = ssub.s32 %s24, %s33
      %s44 = sor.u32 %s42, %s43
      %p45 = scmp.eq.s32.totalorder %s44, 0
      %s47 = sadd.s32 %s46, 1
      %s48 = scalar_select %p45, %s46, %s47
      %p51 = pneg %p45
      %p52 = scmp.eq.s32.totalorder %s15, 1
      %p53 = por %p51, %p52
      %p54 = scmp.ne.s32.totalorder %s46, %s49
      %p55 = scmp.eq.s32.totalorder %s15, 0
      %p56 = por %p54, %p55
      %p57 = scmp.ne.s32.totalorder %s46, %s49
      %p58 = scmp.eq.s32.totalorder %s20, 1
      %p59 = por %p57, %p58
      %p60 = scmp.ne.s32.totalorder %s49, %s50
      %p61 = scmp.eq.s32.totalorder %s20, 0
      %p62 = por %p60, %p61
      %p63 = scmp.ne.s32.totalorder %s49, %s50
      %p64 = scmp.eq.s32.totalorder %s21, 1
      %p65 = por %p63, %p64
      %p67 = scmp.ne.s32.totalorder %s50, %s66
      %p68 = scmp.eq.s32.totalorder %s21, 0
      %p69 = por %p67, %p68
      %s70 = ssub.s32 %s24, %s33
      %s71 = ssub.s32 %s23, %s37
      %s72 = sor.u32 %s70, %s71
      %p73 = scmp.eq.s32.totalorder %s72, 0
      %s75 = sadd.s32 %s74, 1
      %s76 = scalar_select %p73, %s74, %s75
      %p79 = pneg %p73
      %p80 = scmp.eq.s32.totalorder %s15, 1
      %p81 = por %p79, %p80
      %p82 = scmp.ne.s32.totalorder %s74, %s77
      %p83 = scmp.eq.s32.totalorder %s15, 0
      %p84 = por %p82, %p83
      %p85 = scmp.ne.s32.totalorder %s74, %s77
      %p86 = scmp.eq.s32.totalorder %s20, 1
      %p87 = por %p85, %p86
      %p88 = scmp.ne.s32.totalorder %s77, %s78
      %p89 = scmp.eq.s32.totalorder %s20, 0
      %p90 = por %p88, %p89
      %p91 = scmp.ne.s32.totalorder %s77, %s78
      %p92 = scmp.eq.s32.totalorder %s21, 1
      %p93 = por %p91, %p92
      %p95 = scmp.ne.s32.totalorder %s78, %s94
      %p96 = scmp.eq.s32.totalorder %s21, 0
      %p97 = por %p95, %p96
      %s98 = ssub.s32 %s23, %s37
      %p99 = scmp.eq.s32.totalorder %s98, 0
      %s101 = sadd.s32 %s100, 1
      %s102 = scalar_select %p99, %s100, %s101
      %p105 = pneg %p99
      %p106 = scmp.eq.s32.totalorder %s15, 1
      %p107 = por %p105, %p106
      %p108 = scmp.ne.s32.totalorder %s100, %s103
      %p109 = scmp.eq.s32.totalorder %s15, 0
      %p110 = por %p108, %p109
      %p111 = scmp.ne.s32.totalorder %s100, %s103
      %p112 = scmp.eq.s32.totalorder %s20, 1
      %p113 = por %p111, %p112
      %p114 = scmp.ne.s32.totalorder %s103, %s104
      %p115 = scmp.eq.s32.totalorder %s20, 0
      %p116 = por %p114, %p115
      %p117 = scmp.ne.s32.totalorder %s103, %s104
      %p118 = scmp.eq.s32.totalorder %s21, 1
      %p119 = por %p117, %p118
      %p121 = scmp.ne.s32.totalorder %s104, %s120
      %p122 = scmp.eq.s32.totalorder %s21, 0
      %p123 = por %p121, %p122
      %s124 = ssub.s32 %s22, %s41
      %s125 = ssub.s32 %s23, %s37
      %s126 = sor.u32 %s124, %s125
      %p127 = scmp.eq.s32.totalorder %s126, 0
      %s129 = sadd.s32 %s128, 1
      %s130 = scalar_select %p127, %s128, %s129
      %p133 = pneg %p127
      %p134 = scmp.eq.s32.totalorder %s15, 1
      %p135 = por %p133, %p134
      %p136 = scmp.ne.s32.totalorder %s128, %s131
      %p137 = scmp.eq.s32.totalorder %s15, 0
      %p138 = por %p136, %p137
      %p139 = scmp.ne.s32.totalorder %s128, %s131
      %p140 = scmp.eq.s32.totalorder %s20, 1
      %p141 = por %p139, %p140
      %p142 = scmp.ne.s32.totalorder %s131, %s132
      %p143 = scmp.eq.s32.totalorder %s20, 0
      %p144 = por %p142, %p143
      %p145 = scmp.ne.s32.totalorder %s131, %s132
      %p146 = scmp.eq.s32.totalorder %s21, 1
      %p147 = por %p145, %p146
      %p149 = scmp.ne.s32.totalorder %s132, %s148
      %p150 = scmp.eq.s32.totalorder %s21, 0
      %p151 = por %p149, %p150
      %p152 = scmp.le.s32.totalorder 1, %s15
      %p153 = scmp.lt.s32.totalorder %s15, 3
      %p154 = pnand %p152, %p153
      %p155 = pneg %p154
      // Predicated region
      $region9: #{tpu_custom_call.1} parent=5 // pred_check
        _
      $region10: #{tpu_custom_call.1} parent=5 // pred_check_branch
        %157 = sbr.rel (%p154) target = $region12
      $region11: #{tpu_custom_call.1} parent=5 // pred_region
        %s158 = ssub.s32 %s15, 1
        // Predicated region
        $region13: #{tpu_custom_call.1} parent=11 // pred_check
          %p159 = pneg %p62
        $region14: #{tpu_custom_call.1} parent=11 // pred_check_branch
          %161 = sbr.rel (%p159) target = $region16
        $region15: #{tpu_custom_call.1} parent=11 // pred_region
          %s162 = smul.u32 8, %s25
          %p163 = scmp.lt.s32.totalorder %s162, 7
          %s164 = scalar_select %p163, %s162, 7
          %p165 = scmp.lt.s32.totalorder %s27, 0
          %s166 = scalar_select %p165, %s27, 0
          %s167 = sadd.s32 %s166, %s164
          %s168 = smul.addr %s167, 4
          %s169 = scalar_lea.vmem %s0, %s168
          %s170 = smul.u32 8, %s25
        $region16: #{tpu_custom_call.1} parent=11 // pred_fallthru
          _
      $region12: #{tpu_custom_call.1} parent=5 // pred_fallthru
        _
      %p171 = scmp.lt.s32.totalorder %s15, 2
      // Predicated region
      $region17: #{tpu_custom_call.1} parent=5 // pred_check
        %p172 = pneg %p171
      $region18: #{tpu_custom_call.1} parent=5 // pred_check_branch
        %174 = sbr.rel (%p172) target = $region20
      $region19: #{tpu_custom_call.1} parent=5 // pred_region
        // Predicated region
        $region21: #{tpu_custom_call.1} parent=19 // pred_check
          %p175 = pneg %p84
        $region22: #{tpu_custom_call.1} parent=19 // pred_check_branch
          %177 = sbr.rel (%p175) target = $region24
        $region23: #{tpu_custom_call.1} parent=19 // pred_region
          %s178 = smul.u32 8, %s23
          %p179 = scmp.lt.s32.totalorder %s24, 0
          %s180 = scalar_select %p179, %s24, 0
          %p181 = scmp.lt.s32.totalorder %s178, 15
          %s182 = scalar_select %p181, %s178, 15
          %s183 = smul.addr %s180, 16
          %s184 = sadd.s32 %s182, %s183
          %s185 = smul.addr %s184, 2
          %s186 = scalar_lea.vmem %s1, %s185
          %s187 = smul.u32 8, %s23
        $region24: #{tpu_custom_call.1} parent=19 // pred_fallthru
          _
        // Predicated region
        $region25: #{tpu_custom_call.1} parent=19 // pred_check
          %p188 = pneg %p110
        $region26: #{tpu_custom_call.1} parent=19 // pred_check_branch
          %190 = sbr.rel (%p188) target = $region28
        $region27: #{tpu_custom_call.1} parent=19 // pred_region
          %s191 = sand.u32 %s100, 1
          %s192 = scalar_lea.sflag [#allocation4], %s191
          %s193 = sand.u32 %s100, 1
          %s194 = smul.addr %s193, 8
          %s195 = scalar_lea.vmem [#allocation3], %s194
          %s196 = smul.u32 8, %s23
          %s198 = ssub.s32 128, 128
          %199 = vsyncadd %s192, %s198
          %s200 = smul.addr %s196, 16
          %s201 = scalar_lea.hbm %s2, %s200
          %s203 = sshll.u32 %s195, 4
          %s204 = int_to_ptr.vmem [resolvable:$true] %s203
          %206 = dma.hbm_to_vmem [thread:$0]  %s201, 128, %s204, %s192
        $region28: #{tpu_custom_call.1} parent=19 // pred_fallthru
          _
      $region20: #{tpu_custom_call.1} parent=5 // pred_fallthru
        _
      %p207 = scmp.le.s32.totalorder 1, %s15
      %p208 = scmp.lt.s32.totalorder %s15, 3
      %p209 = pnand %p207, %p208
      %p210 = pneg %p209
      // Predicated region
      $region29: #{tpu_custom_call.1} parent=5 // pred_check
        _
      $region30: #{tpu_custom_call.1} parent=5 // pred_check_branch
        %212 = sbr.rel (%p209) target = $region32
      $region31: #{tpu_custom_call.1} parent=5 // pred_region
        %s213 = ssub.s32 %s15, 1
        %s214 = sand.u32 %s103, 1
        %s215 = scalar_lea.sflag [#allocation4], %s214
        %s216 = sand.u32 %s103, 1
        %s217 = smul.addr %s216, 8
        %s218 = scalar_lea.vmem [#allocation3], %s217
        // Predicated region
        $region33: #{tpu_custom_call.1} parent=31 // pred_check
          %p219 = pneg %p116
        $region34: #{tpu_custom_call.1} parent=31 // pred_check_branch
          %221 = sbr.rel (%p219) target = $region36
        $region35: #{tpu_custom_call.1} parent=31 // pred_region
          %222 = dma.done %s215, 128
        $region36: #{tpu_custom_call.1} parent=31 // pred_fallthru
          _
        %s223 = smul.u32 8, %s25
        %p224 = scmp.lt.s32.totalorder %s223, 7
        %s225 = scalar_select %p224, %s223, 7
        %p226 = scmp.lt.s32.totalorder %s27, 0
        %s227 = scalar_select %p226, %s27, 0
        %s228 = sadd.s32 %s227, %s225
        %s229 = smul.addr %s228, 4
        %s230 = scalar_lea.vmem %s0, %s229
        %p231 = pneg %p62
        %p232 = pneg %p59
        %s233 = smul.u32 8, %s26
        %p234 = scmp.lt.s32.totalorder %s27, 0
        %s235 = scalar_select %p234, %s27, 0
        %p236 = scmp.lt.s32.totalorder %s233, 15
        %s237 = scalar_select %p236, %s233, 15
        %s238 = smul.addr %s235, 16
        %s239 = sadd.s32 %s237, %s238
        %s240 = smul.addr %s239, 2
        %s241 = scalar_lea.vmem %s1, %s240
        %p242 = pneg %p90
        %p243 = pneg %p87
        %s244 = sand.u32 %s103, 1
        %s245 = scalar_lea.sflag [#allocation4], %s244
        %s246 = sand.u32 %s103, 1
        %s247 = smul.addr %s246, 8
        %s248 = scalar_lea.vmem [#allocation3], %s247
        %p249 = pneg %p116
        %p250 = pneg %p113
        %p251 = pneg %p144
        %p252 = pneg %p141
        %s253 = sand.u32 %s131, 1
        %s254 = scalar_lea.sflag [#allocation5], %s253
        %s255 = sand.u32 %s131, 1
        %s256 = smul.addr %s255, 256
        %s257 = scalar_lea.vmem [#allocation6], %s256
        %s258 = smul.u32 8, %s25
        %p259 = scmp.lt.s32.totalorder %s258, 7
        %s260 = scalar_select %p259, %s258, 7
        %p261 = scmp.lt.s32.totalorder %s27, 0
        %s262 = scalar_select %p261, %s27, 0
        %s263 = sadd.s32 %s262, %s260
        %s264 = smul.addr %s263, 4
        %s265 = scalar_lea.vmem %s0, %s264
        %s266 = smul.u32 8, %s25
        %s267 = smul.u32 8, %s26
        %p268 = scmp.lt.s32.totalorder %s27, 0
        %s269 = scalar_select %p268, %s27, 0
        %p270 = scmp.lt.s32.totalorder %s267, 15
        %s271 = scalar_select %p270, %s267, 15
        %s272 = smul.addr %s269, 16
        %s273 = sadd.s32 %s271, %s272
        %s274 = smul.addr %s273, 2
        %s275 = scalar_lea.vmem %s1, %s274
        %s276 = smul.u32 8, %s26
        %s277 = smul.u32 8, %s26
        %s278 = smul.u32 8, %s25
        %s279 = smul.u32 8, %s26
        %p281 = scmp.eq.s32.totalorder %s27, 0
        // Predicated region
        $region37: #{tpu_custom_call.1} parent=31 // pred_check
          %p282 = pneg %p281
        $region38: #{tpu_custom_call.1} parent=31 // pred_check_branch
          %284 = sbr.rel (%p282) target = $region40
        $region39: #{tpu_custom_call.1} parent=31 // pred_region
          %285 = vst [vmem:[#allocation2] sm:$0xff] 0.0
          %286 = vst [vmem:[#allocation2 + $0x8] sm:$0xff] 0.0
          %287 = vst [vmem:[#allocation2 + $0x10] sm:$0xff] 0.0
          %288 = vst [vmem:[#allocation2 + $0x18] sm:$0xff] 0.0
          %289 = vst [vmem:[#allocation2 + $0x20] sm:$0xff] 0.0
          %290 = vst [vmem:[#allocation2 + $0x28] sm:$0xff] 0.0
          %291 = vst [vmem:[#allocation2 + $0x30] sm:$0xff] 0.0
          %292 = vst [vmem:[#allocation2 + $0x38] sm:$0xff] 0.0
          %293 = vst [vmem:[#allocation2 + $0x40] sm:$0xff] 0.0
          %294 = vst [vmem:[#allocation2 + $0x48] sm:$0xff] 0.0
          %295 = vst [vmem:[#allocation2 + $0x50] sm:$0xff] 0.0
          %296 = vst [vmem:[#allocation2 + $0x58] sm:$0xff] 0.0
          %297 = vst [vmem:[#allocation2 + $0x60] sm:$0xff] 0.0
          %298 = vst [vmem:[#allocation2 + $0x68] sm:$0xff] 0.0
          %299 = vst [vmem:[#allocation2 + $0x70] sm:$0xff] 0.0
          %300 = vst [vmem:[#allocation2 + $0x78] sm:$0xff] 0.0
          %301 = vst [vmem:[#allocation2 + $0x80] sm:$0xff] 0.0
          %302 = vst [vmem:[#allocation2 + $0x88] sm:$0xff] 0.0
          %303 = vst [vmem:[#allocation2 + $0x90] sm:$0xff] 0.0
          %304 = vst [vmem:[#allocation2 + $0x98] sm:$0xff] 0.0
          %305 = vst [vmem:[#allocation2 + $0xa0] sm:$0xff] 0.0
          %306 = vst [vmem:[#allocation2 + $0xa8] sm:$0xff] 0.0
          %307 = vst [vmem:[#allocation2 + $0xb0] sm:$0xff] 0.0
          %308 = vst [vmem:[#allocation2 + $0xb8] sm:$0xff] 0.0
          %309 = vst [vmem:[#allocation2 + $0xc0] sm:$0xff] 0.0
          %310 = vst [vmem:[#allocation2 + $0xc8] sm:$0xff] 0.0
          %311 = vst [vmem:[#allocation2 + $0xd0] sm:$0xff] 0.0
          %312 = vst [vmem:[#allocation2 + $0xd8] sm:$0xff] 0.0
          %313 = vst [vmem:[#allocation2 + $0xe0] sm:$0xff] 0.0
          %314 = vst [vmem:[#allocation2 + $0xe8] sm:$0xff] 0.0
          %315 = vst [vmem:[#allocation2 + $0xf0] sm:$0xff] 0.0
          %316 = vst [vmem:[#allocation2 + $0xf8] sm:$0xff] 0.0
          %317 = vst [vmem:[#allocation2 + $0x100] sm:$0xff] 0.0
          %318 = vst [vmem:[#allocation2 + $0x108] sm:$0xff] 0.0
          %319 = vst [vmem:[#allocation2 + $0x110] sm:$0xff] 0.0
          %320 = vst [vmem:[#allocation2 + $0x118] sm:$0xff] 0.0
          %321 = vst [vmem:[#allocation2 + $0x120] sm:$0xff] 0.0
          %322 = vst [vmem:[#allocation2 + $0x128] sm:$0xff] 0.0
          %323 = vst [vmem:[#allocation2 + $0x130] sm:$0xff] 0.0
          %324 = vst [vmem:[#allocation2 + $0x138] sm:$0xff] 0.0
          %325 = vst [vmem:[#allocation2 + $0x140] sm:$0xff] 0.0
          %326 = vst [vmem:[#allocation2 + $0x148] sm:$0xff] 0.0
          %327 = vst [vmem:[#allocation2 + $0x150] sm:$0xff] 0.0
          %328 = vst [vmem:[#allocation2 + $0x158] sm:$0xff] 0.0
          %329 = vst [vmem:[#allocation2 + $0x160] sm:$0xff] 0.0
          %330 = vst [vmem:[#allocation2 + $0x168] sm:$0xff] 0.0
          %331 = vst [vmem:[#allocation2 + $0x170] sm:$0xff] 0.0
          %332 = vst [vmem:[#allocation2 + $0x178] sm:$0xff] 0.0
          %333 = vst [vmem:[#allocation2 + $0x180] sm:$0xff] 0.0
          %334 = vst [vmem:[#allocation2 + $0x188] sm:$0xff] 0.0
          %335 = vst [vmem:[#allocation2 + $0x190] sm:$0xff] 0.0
          %336 = vst [vmem:[#allocation2 + $0x198] sm:$0xff] 0.0
          %337 = vst [vmem:[#allocation2 + $0x1a0] sm:$0xff] 0.0
          %338 = vst [vmem:[#allocation2 + $0x1a8] sm:$0xff] 0.0
          %339 = vst [vmem:[#allocation2 + $0x1b0] sm:$0xff] 0.0
          %340 = vst [vmem:[#allocation2 + $0x1b8] sm:$0xff] 0.0
          %341 = vst [vmem:[#allocation2 + $0x1c0] sm:$0xff] 0.0
          %342 = vst [vmem:[#allocation2 + $0x1c8] sm:$0xff] 0.0
          %343 = vst [vmem:[#allocation2 + $0x1d0] sm:$0xff] 0.0
          %344 = vst [vmem:[#allocation2 + $0x1d8] sm:$0xff] 0.0
          %345 = vst [vmem:[#allocation2 + $0x1e0] sm:$0xff] 0.0
          %346 = vst [vmem:[#allocation2 + $0x1e8] sm:$0xff] 0.0
          %347 = vst [vmem:[#allocation2 + $0x1f0] sm:$0xff] 0.0
          %348 = vst [vmem:[#allocation2 + $0x1f8] sm:$0xff] 0.0
        $region40: #{tpu_custom_call.1} parent=31 // pred_fallthru
          _
        %v349 = vld [vmem:[#allocation2] sm:$0xff]
        %v350 = vld [vmem:[#allocation2 + $0x8] sm:$0xff]
        %v351 = vld [vmem:[#allocation2 + $0x10] sm:$0xff]
        %v352 = vld [vmem:[#allocation2 + $0x18] sm:$0xff]
        %v353 = vld [vmem:[#allocation2 + $0x20] sm:$0xff]
        %v354 = vld [vmem:[#allocation2 + $0x28] sm:$0xff]
        %v355 = vld [vmem:[#allocation2 + $0x30] sm:$0xff]
        %v356 = vld [vmem:[#allocation2 + $0x38] sm:$0xff]
        %v357 = vld [vmem:[#allocation2 + $0x40] sm:$0xff]
        %v358 = vld [vmem:[#allocation2 + $0x48] sm:$0xff]
        %v359 = vld [vmem:[#allocation2 + $0x50] sm:$0xff]
        %v360 = vld [vmem:[#allocation2 + $0x58] sm:$0xff]
        %v361 = vld [vmem:[#allocation2 + $0x60] sm:$0xff]
        %v362 = vld [vmem:[#allocation2 + $0x68] sm:$0xff]
        %v363 = vld [vmem:[#allocation2 + $0x70] sm:$0xff]
        %v364 = vld [vmem:[#allocation2 + $0x78] sm:$0xff]
        %v365 = vld [vmem:[#allocation2 + $0x80] sm:$0xff]
        %v366 = vld [vmem:[#allocation2 + $0x88] sm:$0xff]
        %v367 = vld [vmem:[#allocation2 + $0x90] sm:$0xff]
        %v368 = vld [vmem:[#allocation2 + $0x98] sm:$0xff]
        %v369 = vld [vmem:[#allocation2 + $0xa0] sm:$0xff]
        %v370 = vld [vmem:[#allocation2 + $0xa8] sm:$0xff]
        %v371 = vld [vmem:[#allocation2 + $0xb0] sm:$0xff]
        %v372 = vld [vmem:[#allocation2 + $0xb8] sm:$0xff]
        %v373 = vld [vmem:[#allocation2 + $0xc0] sm:$0xff]
        %v374 = vld [vmem:[#allocation2 + $0xc8] sm:$0xff]
        %v375 = vld [vmem:[#allocation2 + $0xd0] sm:$0xff]
        %v376 = vld [vmem:[#allocation2 + $0xd8] sm:$0xff]
        %v377 = vld [vmem:[#allocation2 + $0xe0] sm:$0xff]
        %v378 = vld [vmem:[#allocation2 + $0xe8] sm:$0xff]
        %v379 = vld [vmem:[#allocation2 + $0xf0] sm:$0xff]
        %v380 = vld [vmem:[#allocation2 + $0xf8] sm:$0xff]
        %v381 = vld [vmem:[#allocation2 + $0x100] sm:$0xff]
        %v382 = vld [vmem:[#allocation2 + $0x108] sm:$0xff]
        %v383 = vld [vmem:[#allocation2 + $0x110] sm:$0xff]
        %v384 = vld [vmem:[#allocation2 + $0x118] sm:$0xff]
        %v385 = vld [vmem:[#allocation2 + $0x120] sm:$0xff]
        %v386 = vld [vmem:[#allocation2 + $0x128] sm:$0xff]
        %v387 = vld [vmem:[#allocation2 + $0x130] sm:$0xff]
        %v388 = vld [vmem:[#allocation2 + $0x138] sm:$0xff]
        %v389 = vld [vmem:[#allocation2 + $0x140] sm:$0xff]
        %v390 = vld [vmem:[#allocation2 + $0x148] sm:$0xff]
        %v391 = vld [vmem:[#allocation2 + $0x150] sm:$0xff]
        %v392 = vld [vmem:[#allocation2 + $0x158] sm:$0xff]
        %v393 = vld [vmem:[#allocation2 + $0x160] sm:$0xff]
        %v394 = vld [vmem:[#allocation2 + $0x168] sm:$0xff]
        %v395 = vld [vmem:[#allocation2 + $0x170] sm:$0xff]
        %v396 = vld [vmem:[#allocation2 + $0x178] sm:$0xff]
        %v397 = vld [vmem:[#allocation2 + $0x180] sm:$0xff]
        %v398 = vld [vmem:[#allocation2 + $0x188] sm:$0xff]
        %v399 = vld [vmem:[#allocation2 + $0x190] sm:$0xff]
        %v400 = vld [vmem:[#allocation2 + $0x198] sm:$0xff]
        %v401 = vld [vmem:[#allocation2 + $0x1a0] sm:$0xff]
        %v402 = vld [vmem:[#allocation2 + $0x1a8] sm:$0xff]
        %v403 = vld [vmem:[#allocation2 + $0x1b0] sm:$0xff]
        %v404 = vld [vmem:[#allocation2 + $0x1b8] sm:$0xff]
        %v405 = vld [vmem:[#allocation2 + $0x1c0] sm:$0xff]
        %v406 = vld [vmem:[#allocation2 + $0x1c8] sm:$0xff]
        %v407 = vld [vmem:[#allocation2 + $0x1d0] sm:$0xff]
        %v408 = vld [vmem:[#allocation2 + $0x1d8] sm:$0xff]
        %v409 = vld [vmem:[#allocation2 + $0x1e0] sm:$0xff]
        %v410 = vld [vmem:[#allocation2 + $0x1e8] sm:$0xff]
        %v411 = vld [vmem:[#allocation2 + $0x1f0] sm:$0xff]
        %v412 = vld [vmem:[#allocation2 + $0x1f8] sm:$0xff]
        %v413 = vld [vmem:[%s265] sm:$0xf]
        %v414 = vld [vmem:[%s265 + $0x4] sm:$0xf]
        %v415 = vld [vmem:[%s265 + $0x8] sm:$0xf]
        %v416 = vld [vmem:[%s265 + $0xc] sm:$0xf]
        %v417 = vld [vmem:[%s265 + $0x10] sm:$0xf]
        %v418 = vld [vmem:[%s265 + $0x14] sm:$0xf]
        %v419 = vld [vmem:[%s265 + $0x18] sm:$0xf]
        %v420 = vld [vmem:[%s265 + $0x1c] sm:$0xf]
        %v421 = vld [vmem:[%s275] sm:$0xff]
        %v422 = vld [vmem:[%s275 + $0x8] sm:$0xff]
        %v431 = vunpack.c.l.b16 %v413
        %v432 = vunpack.c.l.b16 %v414
        %v433 = vunpack.c.l.b16 %v415
        %v434 = vunpack.c.l.b16 %v416
        %v435 = vunpack.c.l.b16 %v417
        %v436 = vunpack.c.l.b16 %v418
        %v437 = vunpack.c.l.b16 %v419
        %v438 = vunpack.c.l.b16 %v420
        %v439 = vpack.c.b16 %v432, %v431
        %v440 = vpack.c.b16 %v434, %v433
        %v441 = vpack.c.b16 %v436, %v435
        %v442 = vpack.c.b16 %v438, %v437
        %v445 = vcombine.high %v421, %v421
        %v447 = vunpack.c.l.s4 1983009808
        %v448 = vunpack.c.0.s8 %v447
        %v449 = vlaneseq
        %v450 = vshrl.u32 %v449, 7
        %v451 = vsub.s32 %v448, %v450
        %v452 = vrot.slane %v421, %v451
        %v454 = vunpack.c.l.s4 1983009808
        %v455 = vunpack.c.0.s8 %v454
        %v456 = vlaneseq
        %v457 = vshrl.u32 %v456, 7
        %v458 = vsub.s32 %v455, %v457
        %v459 = vrot.slane %v445, %v458
        %v460 = vcombine.high %v452, %v452
        %v461 = vcombine.high %v459, %v459
        %v462 = vcombine.high %v422, %v422
        %v464 = vunpack.c.l.s4 1983009808
        %v465 = vunpack.c.0.s8 %v464
        %v466 = vlaneseq
        %v467 = vshrl.u32 %v466, 7
        %v468 = vsub.s32 %v465, %v467
        %v469 = vrot.slane %v422, %v468
        %v471 = vunpack.c.l.s4 1983009808
        %v472 = vunpack.c.0.s8 %v471
        %v473 = vlaneseq
        %v474 = vshrl.u32 %v473, 7
        %v475 = vsub.s32 %v472, %v474
        %v476 = vrot.slane %v462, %v475
        %v477 = vcombine.high %v469, %v469
        %v478 = vcombine.high %v476, %v476
        %vm479 = vcmask 31744
        %v481 = vsel %vm479, %v439, 0
        %v484 = vsel %vm479, %v440, 0
        %v487 = vsel %vm479, %v441, 0
        %v490 = vsel %vm479, %v442, 0
        %vm492 = vcmask 1041408
        %v494 = vsel %vm492, %v452, 0
        %v497 = vsel %vm492, %v460, 0
        %v500 = vsel %vm492, %v459, 0
        %v503 = vsel %vm492, %v461, 0
        %v506 = vsel %vm492, %v469, 0
        %v509 = vsel %vm492, %v477, 0
        %v512 = vsel %vm492, %v476, 0
        %v515 = vsel %vm492, %v478, 0
        %517 = vmatprep.subr.bf16.mxu0 0
        %518 = vmatpush1.bf16.msra.mxu0 0
        %519 = vmatprep.subr.bf16.mxu0 0
        %520 = vmatpush1.bf16.msra.mxu0 0
        %521 = vmatprep.subr.bf16.mxu0 0
        %522 = vmatpush1.bf16.msra.mxu0 0
        %523 = vmatprep.subr.bf16.mxu0 0
        %524 = vmatpush1.bf16.msra.mxu0 0
        %525 = vmatprep.subr.bf16.mxu0 0
        %526 = vmatpush1.bf16.msra.mxu0 0
        %527 = vmatprep.subr.bf16.mxu0 0
        %528 = vmatpush1.bf16.msra.mxu0 0
        %529 = vmatprep.subr.bf16.mxu0 0
        %530 = vmatpush1.bf16.msra.mxu0 0
        %531 = vmatprep.subr.bf16.mxu0 %v497
        %532 = vmatpush1.bf16.msra.mxu0 %v494
        %533 = vmatprep.subr.bf16.mxu0 0
        %534 = vmatpush2.bf16.msra.mxu0 0
        %535 = vmatprep.subr.bf16.mxu0 0
        %536 = vmatpush2.bf16.msra.mxu0 0
        %537 = vmatprep.subr.bf16.mxu0 0
        %538 = vmatpush2.bf16.msra.mxu0 0
        %539 = vmatprep.subr.bf16.mxu0 0
        %540 = vmatpush2.bf16.msra.mxu0 0
        %541 = vmatprep.subr.bf16.mxu0 0
        %542 = vmatpush2.bf16.msra.mxu0 0
        %543 = vmatprep.subr.bf16.mxu0 0
        %544 = vmatpush2.bf16.msra.mxu0 0
        %545 = vmatprep.subr.bf16.mxu0 0
        %546 = vmatpush2.bf16.msra.mxu0 0
        %547 = vmatprep.subr.bf16.mxu0 0
        %548 = vmatpush2.bf16.msra.mxu0 0
        %549 = vmatprep.mubr.bf16.mxu0 0
        %550 = vmatmul.mubr.bf16.gmra.mxu0 %v481
        %v551 = vpop.f32.mrf.mxu0
        %v552 = vadd.f32 0.0, %v551
        %v553 = vpop.f32.mrf.mxu0
        %v554 = vadd.f32 0.0, %v553
        %v555 = vpop.f32.mrf.mxu0
        %v556 = vadd.f32 0.0, %v555
        %v557 = vpop.f32.mrf.mxu0
        %v558 = vadd.f32 0.0, %v557
        %559 = vmatprep.mubr.bf16.mxu0 0
        %560 = vmatmul.mubr.bf16.gmra.mxu0 %v484
        %v561 = vpop.f32.mrf.mxu0
        %v562 = vadd.f32 0.0, %v561
        %v563 = vpop.f32.mrf.mxu0
        %v564 = vadd.f32 0.0, %v563
        %v565 = vpop.f32.mrf.mxu0
        %v566 = vadd.f32 0.0, %v565
        %v567 = vpop.f32.mrf.mxu0
        %v568 = vadd.f32 0.0, %v567
        %569 = vmatprep.mubr.bf16.mxu0 0
        %570 = vmatmul.mubr.bf16.gmra.mxu0 %v487
        %v571 = vpop.f32.mrf.mxu0
        %v572 = vadd.f32 0.0, %v571
        %v573 = vpop.f32.mrf.mxu0
        %v574 = vadd.f32 0.0, %v573
        %v575 = vpop.f32.mrf.mxu0
        %v576 = vadd.f32 0.0, %v575
        %v577 = vpop.f32.mrf.mxu0
        %v578 = vadd.f32 0.0, %v577
        %579 = vmatprep.mubr.bf16.mxu0 0
        %580 = vmatmul.mubr.bf16.gmra.mxu0 %v490
        %v581 = vpop.f32.mrf.mxu0
        %v582 = vadd.f32 0.0, %v581
        %v583 = vpop.f32.mrf.mxu0
        %v584 = vadd.f32 0.0, %v583
        %v585 = vpop.f32.mrf.mxu0
        %v586 = vadd.f32 0.0, %v585
        %v587 = vpop.f32.mrf.mxu0
        %v588 = vadd.f32 0.0, %v587
        %589 = vdwg.mxu0
        %590 = vmatprep.subr.bf16.mxu0 0
        %591 = vmatpush1.bf16.msra.mxu0 0
        %592 = vmatprep.subr.bf16.mxu0 0
        %593 = vmatpush1.bf16.msra.mxu0 0
        %594 = vmatprep.subr.bf16.mxu0 0
        %595 = vmatpush1.bf16.msra.mxu0 0
        %596 = vmatprep.subr.bf16.mxu0 0
        %597 = vmatpush1.bf16.msra.mxu0 0
        %598 = vmatprep.subr.bf16.mxu0 0
        %599 = vmatpush1.bf16.msra.mxu0 0
        %600 = vmatprep.subr.bf16.mxu0 0
        %601 = vmatpush1.bf16.msra.mxu0 0
        %602 = vmatprep.subr.bf16.mxu0 0
        %603 = vmatpush1.bf16.msra.mxu0 0
        %604 = vmatprep.subr.bf16.mxu0 %v503
        %605 = vmatpush1.bf16.msra.mxu0 %v500
        %606 = vmatprep.subr.bf16.mxu0 0
        %607 = vmatpush2.bf16.msra.mxu0 0
        %608 = vmatprep.subr.bf16.mxu0 0
        %609 = vmatpush2.bf16.msra.mxu0 0
        %610 = vmatprep.subr.bf16.mxu0 0
        %611 = vmatpush2.bf16.msra.mxu0 0
        %612 = vmatprep.subr.bf16.mxu0 0
        %613 = vmatpush2.bf16.msra.mxu0 0
        %614 = vmatprep.subr.bf16.mxu0 0
        %615 = vmatpush2.bf16.msra.mxu0 0
        %616 = vmatprep.subr.bf16.mxu0 0
        %617 = vmatpush2.bf16.msra.mxu0 0
        %618 = vmatprep.subr.bf16.mxu0 0
        %619 = vmatpush2.bf16.msra.mxu0 0
        %620 = vmatprep.subr.bf16.mxu0 0
        %621 = vmatpush2.bf16.msra.mxu0 0
        %622 = vmatprep.mubr.bf16.mxu0 0
        %623 = vmatmul.mubr.bf16.gmra.mxu0 %v481
        %v624 = vpop.f32.mrf.mxu0
        %v625 = vadd.f32 0.0, %v624
        %v626 = vpop.f32.mrf.mxu0
        %v627 = vadd.f32 0.0, %v626
        %v628 = vpop.f32.mrf.mxu0
        %v629 = vadd.f32 0.0, %v628
        %v630 = vpop.f32.mrf.mxu0
        %v631 = vadd.f32 0.0, %v630
        %632 = vmatprep.mubr.bf16.mxu0 0
        %633 = vmatmul.mubr.bf16.gmra.mxu0 %v484
        %v634 = vpop.f32.mrf.mxu0
        %v635 = vadd.f32 0.0, %v634
        %v636 = vpop.f32.mrf.mxu0
        %v637 = vadd.f32 0.0, %v636
        %v638 = vpop.f32.mrf.mxu0
        %v639 = vadd.f32 0.0, %v638
        %v640 = vpop.f32.mrf.mxu0
        %v641 = vadd.f32 0.0, %v640
        %642 = vmatprep.mubr.bf16.mxu0 0
        %643 = vmatmul.mubr.bf16.gmra.mxu0 %v487
        %v644 = vpop.f32.mrf.mxu0
        %v645 = vadd.f32 0.0, %v644
        %v646 = vpop.f32.mrf.mxu0
        %v647 = vadd.f32 0.0, %v646
        %v648 = vpop.f32.mrf.mxu0
        %v649 = vadd.f32 0.0, %v648
        %v650 = vpop.f32.mrf.mxu0
        %v651 = vadd.f32 0.0, %v650
        %652 = vmatprep.mubr.bf16.mxu0 0
        %653 = vmatmul.mubr.bf16.gmra.mxu0 %v490
        %v654 = vpop.f32.mrf.mxu0
        %v655 = vadd.f32 0.0, %v654
        %v656 = vpop.f32.mrf.mxu0
        %v657 = vadd.f32 0.0, %v656
        %v658 = vpop.f32.mrf.mxu0
        %v659 = vadd.f32 0.0, %v658
        %v660 = vpop.f32.mrf.mxu0
        %v661 = vadd.f32 0.0, %v660
        %662 = vdwg.mxu0
        %663 = vmatprep.subr.bf16.mxu0 0
        %664 = vmatpush1.bf16.msra.mxu0 0
        %665 = vmatprep.subr.bf16.mxu0 0
        %666 = vmatpush1.bf16.msra.mxu0 0
        %667 = vmatprep.subr.bf16.mxu0 0
        %668 = vmatpush1.bf16.msra.mxu0 0
        %669 = vmatprep.subr.bf16.mxu0 0
        %670 = vmatpush1.bf16.msra.mxu0 0
        %671 = vmatprep.subr.bf16.mxu0 0
        %672 = vmatpush1.bf16.msra.mxu0 0
        %673 = vmatprep.subr.bf16.mxu0 0
        %674 = vmatpush1.bf16.msra.mxu0 0
        %675 = vmatprep.subr.bf16.mxu0 0
        %676 = vmatpush1.bf16.msra.mxu0 0
        %677 = vmatprep.subr.bf16.mxu0 %v509
        %678 = vmatpush1.bf16.msra.mxu0 %v506
        %679 = vmatprep.subr.bf16.mxu0 0
        %680 = vmatpush2.bf16.msra.mxu0 0
        %681 = vmatprep.subr.bf16.mxu0 0
        %682 = vmatpush2.bf16.msra.mxu0 0
        %683 = vmatprep.subr.bf16.mxu0 0
        %684 = vmatpush2.bf16.msra.mxu0 0
        %685 = vmatprep.subr.bf16.mxu0 0
        %686 = vmatpush2.bf16.msra.mxu0 0
        %687 = vmatprep.subr.bf16.mxu0 0
        %688 = vmatpush2.bf16.msra.mxu0 0
        %689 = vmatprep.subr.bf16.mxu0 0
        %690 = vmatpush2.bf16.msra.mxu0 0
        %691 = vmatprep.subr.bf16.mxu0 0
        %692 = vmatpush2.bf16.msra.mxu0 0
        %693 = vmatprep.subr.bf16.mxu0 0
        %694 = vmatpush2.bf16.msra.mxu0 0
        %695 = vmatprep.mubr.bf16.mxu0 0
        %696 = vmatmul.mubr.bf16.gmra.mxu0 %v481
        %v697 = vpop.f32.mrf.mxu0
        %v698 = vadd.f32 0.0, %v697
        %v699 = vpop.f32.mrf.mxu0
        %v700 = vadd.f32 0.0, %v699
        %v701 = vpop.f32.mrf.mxu0
        %v702 = vadd.f32 0.0, %v701
        %v703 = vpop.f32.mrf.mxu0
        %v704 = vadd.f32 0.0, %v703
        %705 = vmatprep.mubr.bf16.mxu0 0
        %706 = vmatmul.mubr.bf16.gmra.mxu0 %v484
        %v707 = vpop.f32.mrf.mxu0
        %v708 = vadd.f32 0.0, %v707
        %v709 = vpop.f32.mrf.mxu0
        %v710 = vadd.f32 0.0, %v709
        %v711 = vpop.f32.mrf.mxu0
        %v712 = vadd.f32 0.0, %v711
        %v713 = vpop.f32.mrf.mxu0
        %v714 = vadd.f32 0.0, %v713
        %715 = vmatprep.mubr.bf16.mxu0 0
        %716 = vmatmul.mubr.bf16.gmra.mxu0 %v487
        %v717 = vpop.f32.mrf.mxu0
        %v718 = vadd.f32 0.0, %v717
        %v719 = vpop.f32.mrf.mxu0
        %v720 = vadd.f32 0.0, %v719
        %v721 = vpop.f32.mrf.mxu0
        %v722 = vadd.f32 0.0, %v721
        %v723 = vpop.f32.mrf.mxu0
        %v724 = vadd.f32 0.0, %v723
        %725 = vmatprep.mubr.bf16.mxu0 0
        %726 = vmatmul.mubr.bf16.gmra.mxu0 %v490
        %v727 = vpop.f32.mrf.mxu0
        %v728 = vadd.f32 0.0, %v727
        %v729 = vpop.f32.mrf.mxu0
        %v730 = vadd.f32 0.0, %v729
        %v731 = vpop.f32.mrf.mxu0
        %v732 = vadd.f32 0.0, %v731
        %v733 = vpop.f32.mrf.mxu0
        %v734 = vadd.f32 0.0, %v733
        %735 = vdwg.mxu0
        %736 = vmatprep.subr.bf16.mxu0 0
        %737 = vmatpush1.bf16.msra.mxu0 0
        %738 = vmatprep.subr.bf16.mxu0 0
        %739 = vmatpush1.bf16.msra.mxu0 0
        %740 = vmatprep.subr.bf16.mxu0 0
        %741 = vmatpush1.bf16.msra.mxu0 0
        %742 = vmatprep.subr.bf16.mxu0 0
        %743 = vmatpush1.bf16.msra.mxu0 0
        %744 = vmatprep.subr.bf16.mxu0 0
        %745 = vmatpush1.bf16.msra.mxu0 0
        %746 = vmatprep.subr.bf16.mxu0 0
        %747 = vmatpush1.bf16.msra.mxu0 0
        %748 = vmatprep.subr.bf16.mxu0 0
        %749 = vmatpush1.bf16.msra.mxu0 0
        %750 = vmatprep.subr.bf16.mxu0 %v515
        %751 = vmatpush1.bf16.msra.mxu0 %v512
        %752 = vmatprep.subr.bf16.mxu0 0
        %753 = vmatpush2.bf16.msra.mxu0 0
        %754 = vmatprep.subr.bf16.mxu0 0
        %755 = vmatpush2.bf16.msra.mxu0 0
        %756 = vmatprep.subr.bf16.mxu0 0
        %757 = vmatpush2.bf16.msra.mxu0 0
        %758 = vmatprep.subr.bf16.mxu0 0
        %759 = vmatpush2.bf16.msra.mxu0 0
        %760 = vmatprep.subr.bf16.mxu0 0
        %761 = vmatpush2.bf16.msra.mxu0 0
        %762 = vmatprep.subr.bf16.mxu0 0
        %763 = vmatpush2.bf16.msra.mxu0 0
        %764 = vmatprep.subr.bf16.mxu0 0
        %765 = vmatpush2.bf16.msra.mxu0 0
        %766 = vmatprep.subr.bf16.mxu0 0
        %767 = vmatpush2.bf16.msra.mxu0 0
        %768 = vmatprep.mubr.bf16.mxu0 0
        %769 = vmatmul.mubr.bf16.gmra.mxu0 %v481
        %v770 = vpop.f32.mrf.mxu0
        %v771 = vadd.f32 0.0, %v770
        %v772 = vpop.f32.mrf.mxu0
        %v773 = vadd.f32 0.0, %v772
        %v774 = vpop.f32.mrf.mxu0
        %v775 = vadd.f32 0.0, %v774
        %v776 = vpop.f32.mrf.mxu0
        %v777 = vadd.f32 0.0, %v776
        %778 = vmatprep.mubr.bf16.mxu0 0
        %779 = vmatmul.mubr.bf16.gmra.mxu0 %v484
        %v780 = vpop.f32.mrf.mxu0
        %v781 = vadd.f32 0.0, %v780
        %v782 = vpop.f32.mrf.mxu0
        %v783 = vadd.f32 0.0, %v782
        %v784 = vpop.f32.mrf.mxu0
        %v785 = vadd.f32 0.0, %v784
        %v786 = vpop.f32.mrf.mxu0
        %v787 = vadd.f32 0.0, %v786
        %788 = vmatprep.mubr.bf16.mxu0 0
        %789 = vmatmul.mubr.bf16.gmra.mxu0 %v487
        %v790 = vpop.f32.mrf.mxu0
        %v791 = vadd.f32 0.0, %v790
        %v792 = vpop.f32.mrf.mxu0
        %v793 = vadd.f32 0.0, %v792
        %v794 = vpop.f32.mrf.mxu0
        %v795 = vadd.f32 0.0, %v794
        %v796 = vpop.f32.mrf.mxu0
        %v797 = vadd.f32 0.0, %v796
        %798 = vmatprep.mubr.bf16.mxu0 0
        %799 = vmatmul.mubr.bf16.gmra.mxu0 %v490
        %v800 = vpop.f32.mrf.mxu0
        %v801 = vadd.f32 0.0, %v800
        %v802 = vpop.f32.mrf.mxu0
        %v803 = vadd.f32 0.0, %v802
        %v804 = vpop.f32.mrf.mxu0
        %v805 = vadd.f32 0.0, %v804
        %v806 = vpop.f32.mrf.mxu0
        %v807 = vadd.f32 0.0, %v806
        %808 = vdwg.mxu0
        %v809 = vadd.f32 %v349, %v552
        %v810 = vadd.f32 %v350, %v554
        %v811 = vadd.f32 %v351, %v625
        %v812 = vadd.f32 %v352, %v627
        %v813 = vadd.f32 %v353, %v698
        %v814 = vadd.f32 %v354, %v700
        %v815 = vadd.f32 %v355, %v771
        %v816 = vadd.f32 %v356, %v773
        %v817 = vadd.f32 %v357, %v556
        %v818 = vadd.f32 %v358, %v558
        %v819 = vadd.f32 %v359, %v629
        %v820 = vadd.f32 %v360, %v631
        %v821 = vadd.f32 %v361, %v702
        %v822 = vadd.f32 %v362, %v704
        %v823 = vadd.f32 %v363, %v775
        %v824 = vadd.f32 %v364, %v777
        %v825 = vadd.f32 %v365, %v562
        %v826 = vadd.f32 %v366, %v564
        %v827 = vadd.f32 %v367, %v635
        %v828 = vadd.f32 %v368, %v637
        %v829 = vadd.f32 %v369, %v708
        %v830 = vadd.f32 %v370, %v710
        %v831 = vadd.f32 %v371, %v781
        %v832 = vadd.f32 %v372, %v783
        %v833 = vadd.f32 %v373, %v566
        %v834 = vadd.f32 %v374, %v568
        %v835 = vadd.f32 %v375, %v639
        %v836 = vadd.f32 %v376, %v641
        %v837 = vadd.f32 %v377, %v712
        %v838 = vadd.f32 %v378, %v714
        %v839 = vadd.f32 %v379, %v785
        %v840 = vadd.f32 %v380, %v787
        %v841 = vadd.f32 %v381, %v572
        %v842 = vadd.f32 %v382, %v574
        %v843 = vadd.f32 %v383, %v645
        %v844 = vadd.f32 %v384, %v647
        %v845 = vadd.f32 %v385, %v718
        %v846 = vadd.f32 %v386, %v720
        %v847 = vadd.f32 %v387, %v791
        %v848 = vadd.f32 %v388, %v793
        %v849 = vadd.f32 %v389, %v576
        %v850 = vadd.f32 %v390, %v578
        %v851 = vadd.f32 %v391, %v649
        %v852 = vadd.f32 %v392, %v651
        %v853 = vadd.f32 %v393, %v722
        %v854 = vadd.f32 %v394, %v724
        %v855 = vadd.f32 %v395, %v795
        %v856 = vadd.f32 %v396, %v797
        %v857 = vadd.f32 %v397, %v582
        %v858 = vadd.f32 %v398, %v584
        %v859 = vadd.f32 %v399, %v655
        %v860 = vadd.f32 %v400, %v657
        %v861 = vadd.f32 %v401, %v728
        %v862 = vadd.f32 %v402, %v730
        %v863 = vadd.f32 %v403, %v801
        %v864 = vadd.f32 %v404, %v803
        %v865 = vadd.f32 %v405, %v586
        %v866 = vadd.f32 %v406, %v588
        %v867 = vadd.f32 %v407, %v659
        %v868 = vadd.f32 %v408, %v661
        %v869 = vadd.f32 %v409, %v732
        %v870 = vadd.f32 %v410, %v734
        %v871 = vadd.f32 %v411, %v805
        %v872 = vadd.f32 %v412, %v807
        %873 = vst [vmem:[#allocation2] sm:$0xff] %v809
        %874 = vst [vmem:[#allocation2 + $0x8] sm:$0xff] %v810
        %875 = vst [vmem:[#allocation2 + $0x10] sm:$0xff] %v811
        %876 = vst [vmem:[#allocation2 + $0x18] sm:$0xff] %v812
        %877 = vst [vmem:[#allocation2 + $0x20] sm:$0xff] %v813
        %878 = vst [vmem:[#allocation2 + $0x28] sm:$0xff] %v814
        %879 = vst [vmem:[#allocation2 + $0x30] sm:$0xff] %v815
        %880 = vst [vmem:[#allocation2 + $0x38] sm:$0xff] %v816
        %881 = vst [vmem:[#allocation2 + $0x40] sm:$0xff] %v817
        %882 = vst [vmem:[#allocation2 + $0x48] sm:$0xff] %v818
        %883 = vst [vmem:[#allocation2 + $0x50] sm:$0xff] %v819
        %884 = vst [vmem:[#allocation2 + $0x58] sm:$0xff] %v820
        %885 = vst [vmem:[#allocation2 + $0x60] sm:$0xff] %v821
        %886 = vst [vmem:[#allocation2 + $0x68] sm:$0xff] %v822
        %887 = vst [vmem:[#allocation2 + $0x70] sm:$0xff] %v823
        %888 = vst [vmem:[#allocation2 + $0x78] sm:$0xff] %v824
        %889 = vst [vmem:[#allocation2 + $0x80] sm:$0xff] %v825
        %890 = vst [vmem:[#allocation2 + $0x88] sm:$0xff] %v826
        %891 = vst [vmem:[#allocation2 + $0x90] sm:$0xff] %v827
        %892 = vst [vmem:[#allocation2 + $0x98] sm:$0xff] %v828
        %893 = vst [vmem:[#allocation2 + $0xa0] sm:$0xff] %v829
        %894 = vst [vmem:[#allocation2 + $0xa8] sm:$0xff] %v830
        %895 = vst [vmem:[#allocation2 + $0xb0] sm:$0xff] %v831
        %896 = vst [vmem:[#allocation2 + $0xb8] sm:$0xff] %v832
        %897 = vst [vmem:[#allocation2 + $0xc0] sm:$0xff] %v833
        %898 = vst [vmem:[#allocation2 + $0xc8] sm:$0xff] %v834
        %899 = vst [vmem:[#allocation2 + $0xd0] sm:$0xff] %v835
        %900 = vst [vmem:[#allocation2 + $0xd8] sm:$0xff] %v836
        %901 = vst [vmem:[#allocation2 + $0xe0] sm:$0xff] %v837
        %902 = vst [vmem:[#allocation2 + $0xe8] sm:$0xff] %v838
        %903 = vst [vmem:[#allocation2 + $0xf0] sm:$0xff] %v839
        %904 = vst [vmem:[#allocation2 + $0xf8] sm:$0xff] %v840
        %905 = vst [vmem:[#allocation2 + $0x100] sm:$0xff] %v841
        %906 = vst [vmem:[#allocation2 + $0x108] sm:$0xff] %v842
        %907 = vst [vmem:[#allocation2 + $0x110] sm:$0xff] %v843
        %908 = vst [vmem:[#allocation2 + $0x118] sm:$0xff] %v844
        %909 = vst [vmem:[#allocation2 + $0x120] sm:$0xff] %v845
        %910 = vst [vmem:[#allocation2 + $0x128] sm:$0xff] %v846
        %911 = vst [vmem:[#allocation2 + $0x130] sm:$0xff] %v847
        %912 = vst [vmem:[#allocation2 + $0x138] sm:$0xff] %v848
        %913 = vst [vmem:[#allocation2 + $0x140] sm:$0xff] %v849
        %914 = vst [vmem:[#allocation2 + $0x148] sm:$0xff] %v850
        %915 = vst [vmem:[#allocation2 + $0x150] sm:$0xff] %v851
        %916 = vst [vmem:[#allocation2 + $0x158] sm:$0xff] %v852
        %917 = vst [vmem:[#allocation2 + $0x160] sm:$0xff] %v853
        %918 = vst [vmem:[#allocation2 + $0x168] sm:$0xff] %v854
        %919 = vst [vmem:[#allocation2 + $0x170] sm:$0xff] %v855
        %920 = vst [vmem:[#allocation2 + $0x178] sm:$0xff] %v856
        %921 = vst [vmem:[#allocation2 + $0x180] sm:$0xff] %v857
        %922 = vst [vmem:[#allocation2 + $0x188] sm:$0xff] %v858
        %923 = vst [vmem:[#allocation2 + $0x190] sm:$0xff] %v859
        %924 = vst [vmem:[#allocation2 + $0x198] sm:$0xff] %v860
        %925 = vst [vmem:[#allocation2 + $0x1a0] sm:$0xff] %v861
        %926 = vst [vmem:[#allocation2 + $0x1a8] sm:$0xff] %v862
        %927 = vst [vmem:[#allocation2 + $0x1b0] sm:$0xff] %v863
        %928 = vst [vmem:[#allocation2 + $0x1b8] sm:$0xff] %v864
        %929 = vst [vmem:[#allocation2 + $0x1c0] sm:$0xff] %v865
        %930 = vst [vmem:[#allocation2 + $0x1c8] sm:$0xff] %v866
        %931 = vst [vmem:[#allocation2 + $0x1d0] sm:$0xff] %v867
        %932 = vst [vmem:[#allocation2 + $0x1d8] sm:$0xff] %v868
        %933 = vst [vmem:[#allocation2 + $0x1e0] sm:$0xff] %v869
        %934 = vst [vmem:[#allocation2 + $0x1e8] sm:$0xff] %v870
        %935 = vst [vmem:[#allocation2 + $0x1f0] sm:$0xff] %v871
        %936 = vst [vmem:[#allocation2 + $0x1f8] sm:$0xff] %v872
        // Predicated region
        $region41: #{tpu_custom_call.1} parent=31 // pred_check
          %p937 = pneg %p281
        $region42: #{tpu_custom_call.1} parent=31 // pred_check_branch
          %939 = sbr.rel (%p937) target = $region44
        $region43: #{tpu_custom_call.1} parent=31 // pred_region
          %v940 = vld [vmem:[#allocation2] sm:$0xff]
          %v941 = vld [vmem:[#allocation2 + $0x8] sm:$0xff]
          %v942 = vld [vmem:[#allocation2 + $0x10] sm:$0xff]
          %v943 = vld [vmem:[#allocation2 + $0x18] sm:$0xff]
          %v944 = vld [vmem:[#allocation2 + $0x20] sm:$0xff]
          %v945 = vld [vmem:[#allocation2 + $0x28] sm:$0xff]
          %v946 = vld [vmem:[#allocation2 + $0x30] sm:$0xff]
          %v947 = vld [vmem:[#allocation2 + $0x38] sm:$0xff]
          %v948 = vld [vmem:[#allocation2 + $0x40] sm:$0xff]
          %v949 = vld [vmem:[#allocation2 + $0x48] sm:$0xff]
          %v950 = vld [vmem:[#allocation2 + $0x50] sm:$0xff]
          %v951 = vld [vmem:[#allocation2 + $0x58] sm:$0xff]
          %v952 = vld [vmem:[#allocation2 + $0x60] sm:$0xff]
          %v953 = vld [vmem:[#allocation2 + $0x68] sm:$0xff]
          %v954 = vld [vmem:[#allocation2 + $0x70] sm:$0xff]
          %v955 = vld [vmem:[#allocation2 + $0x78] sm:$0xff]
          %v956 = vld [vmem:[#allocation2 + $0x80] sm:$0xff]
          %v957 = vld [vmem:[#allocation2 + $0x88] sm:$0xff]
          %v958 = vld [vmem:[#allocation2 + $0x90] sm:$0xff]
          %v959 = vld [vmem:[#allocation2 + $0x98] sm:$0xff]
          %v960 = vld [vmem:[#allocation2 + $0xa0] sm:$0xff]
          %v961 = vld [vmem:[#allocation2 + $0xa8] sm:$0xff]
          %v962 = vld [vmem:[#allocation2 + $0xb0] sm:$0xff]
          %v963 = vld [vmem:[#allocation2 + $0xb8] sm:$0xff]
          %v964 = vld [vmem:[#allocation2 + $0xc0] sm:$0xff]
          %v965 = vld [vmem:[#allocation2 + $0xc8] sm:$0xff]
          %v966 = vld [vmem:[#allocation2 + $0xd0] sm:$0xff]
          %v967 = vld [vmem:[#allocation2 + $0xd8] sm:$0xff]
          %v968 = vld [vmem:[#allocation2 + $0xe0] sm:$0xff]
          %v969 = vld [vmem:[#allocation2 + $0xe8] sm:$0xff]
          %v970 = vld [vmem:[#allocation2 + $0xf0] sm:$0xff]
          %v971 = vld [vmem:[#allocation2 + $0xf8] sm:$0xff]
          %v972 = vld [vmem:[#allocation2 + $0x100] sm:$0xff]
          %v973 = vld [vmem:[#allocation2 + $0x108] sm:$0xff]
          %v974 = vld [vmem:[#allocation2 + $0x110] sm:$0xff]
          %v975 = vld [vmem:[#allocation2 + $0x118] sm:$0xff]
          %v976 = vld [vmem:[#allocation2 + $0x120] sm:$0xff]
          %v977 = vld [vmem:[#allocation2 + $0x128] sm:$0xff]
          %v978 = vld [vmem:[#allocation2 + $0x130] sm:$0xff]
          %v979 = vld [vmem:[#allocation2 + $0x138] sm:$0xff]
          %v980 = vld [vmem:[#allocation2 + $0x140] sm:$0xff]
          %v981 = vld [vmem:[#allocation2 + $0x148] sm:$0xff]
          %v982 = vld [vmem:[#allocation2 + $0x150] sm:$0xff]
          %v983 = vld [vmem:[#allocation2 + $0x158] sm:$0xff]
          %v984 = vld [vmem:[#allocation2 + $0x160] sm:$0xff]
          %v985 = vld [vmem:[#allocation2 + $0x168] sm:$0xff]
          %v986 = vld [vmem:[#allocation2 + $0x170] sm:$0xff]
          %v987 = vld [vmem:[#allocation2 + $0x178] sm:$0xff]
          %v988 = vld [vmem:[#allocation2 + $0x180] sm:$0xff]
          %v989 = vld [vmem:[#allocation2 + $0x188] sm:$0xff]
          %v990 = vld [vmem:[#allocation2 + $0x190] sm:$0xff]
          %v991 = vld [vmem:[#allocation2 + $0x198] sm:$0xff]
          %v992 = vld [vmem:[#allocation2 + $0x1a0] sm:$0xff]
          %v993 = vld [vmem:[#allocation2 + $0x1a8] sm:$0xff]
          %v994 = vld [vmem:[#allocation2 + $0x1b0] sm:$0xff]
          %v995 = vld [vmem:[#allocation2 + $0x1b8] sm:$0xff]
          %v996 = vld [vmem:[#allocation2 + $0x1c0] sm:$0xff]
          %v997 = vld [vmem:[#allocation2 + $0x1c8] sm:$0xff]
          %v998 = vld [vmem:[#allocation2 + $0x1d0] sm:$0xff]
          %v999 = vld [vmem:[#allocation2 + $0x1d8] sm:$0xff]
          %v1000 = vld [vmem:[#allocation2 + $0x1e0] sm:$0xff]
          %v1001 = vld [vmem:[#allocation2 + $0x1e8] sm:$0xff]
          %v1002 = vld [vmem:[#allocation2 + $0x1f0] sm:$0xff]
          %v1003 = vld [vmem:[#allocation2 + $0x1f8] sm:$0xff]
          %v1004 = vld [vmem:[%s218] sm:$0xff]
          %v1006 = vlaneseq
          %v1007 = vshrl.u32 %v1006, 7
          %v1008 = vsub.s32 0, %v1007
          %v1009 = vrot.slane %v1004, %v1008
          %v1010 = vlaneseq
          %v1011 = vshrl.u32 %v1010, 7
          %v1012 = vsub.s32 1, %v1011
          %v1013 = vrot.slane %v1004, %v1012
          %v1014 = vlaneseq
          %v1015 = vshrl.u32 %v1014, 7
          %v1016 = vsub.s32 2, %v1015
          %v1017 = vrot.slane %v1004, %v1016
          %v1018 = vlaneseq
          %v1019 = vshrl.u32 %v1018, 7
          %v1020 = vsub.s32 3, %v1019
          %v1021 = vrot.slane %v1004, %v1020
          %v1022 = vlaneseq
          %v1023 = vshrl.u32 %v1022, 7
          %v1024 = vsub.s32 4, %v1023
          %v1025 = vrot.slane %v1004, %v1024
          %v1026 = vlaneseq
          %v1027 = vshrl.u32 %v1026, 7
          %v1028 = vsub.s32 5, %v1027
          %v1029 = vrot.slane %v1004, %v1028
          %v1030 = vlaneseq
          %v1031 = vshrl.u32 %v1030, 7
          %v1032 = vsub.s32 6, %v1031
          %v1033 = vrot.slane %v1004, %v1032
          %v1034 = vlaneseq
          %v1035 = vshrl.u32 %v1034, 7
          %v1036 = vsub.s32 7, %v1035
          %v1037 = vrot.slane %v1004, %v1036
          %v1046 = vadd.f32 %v940, %v1009
          %v1047 = vadd.f32 %v941, %v1013
          %v1048 = vadd.f32 %v942, %v1017
          %v1049 = vadd.f32 %v943, %v1021
          %v1050 = vadd.f32 %v944, %v1025
          %v1051 = vadd.f32 %v945, %v1029
          %v1052 = vadd.f32 %v946, %v1033
          %v1053 = vadd.f32 %v947, %v1037
          %v1054 = vadd.f32 %v948, %v1009
          %v1055 = vadd.f32 %v949, %v1013
          %v1056 = vadd.f32 %v950, %v1017
          %v1057 = vadd.f32 %v951, %v1021
          %v1058 = vadd.f32 %v952, %v1025
          %v1059 = vadd.f32 %v953, %v1029
          %v1060 = vadd.f32 %v954, %v1033
          %v1061 = vadd.f32 %v955, %v1037
          %v1062 = vadd.f32 %v956, %v1009
          %v1063 = vadd.f32 %v957, %v1013
          %v1064 = vadd.f32 %v958, %v1017
          %v1065 = vadd.f32 %v959, %v1021
          %v1066 = vadd.f32 %v960, %v1025
          %v1067 = vadd.f32 %v961, %v1029
          %v1068 = vadd.f32 %v962, %v1033
          %v1069 = vadd.f32 %v963, %v1037
          %v1070 = vadd.f32 %v964, %v1009
          %v1071 = vadd.f32 %v965, %v1013
          %v1072 = vadd.f32 %v966, %v1017
          %v1073 = vadd.f32 %v967, %v1021
          %v1074 = vadd.f32 %v968, %v1025
          %v1075 = vadd.f32 %v969, %v1029
          %v1076 = vadd.f32 %v970, %v1033
          %v1077 = vadd.f32 %v971, %v1037
          %v1078 = vadd.f32 %v972, %v1009
          %v1079 = vadd.f32 %v973, %v1013
          %v1080 = vadd.f32 %v974, %v1017
          %v1081 = vadd.f32 %v975, %v1021
          %v1082 = vadd.f32 %v976, %v1025
          %v1083 = vadd.f32 %v977, %v1029
          %v1084 = vadd.f32 %v978, %v1033
          %v1085 = vadd.f32 %v979, %v1037
          %v1086 = vadd.f32 %v980, %v1009
          %v1087 = vadd.f32 %v981, %v1013
          %v1088 = vadd.f32 %v982, %v1017
          %v1089 = vadd.f32 %v983, %v1021
          %v1090 = vadd.f32 %v984, %v1025
          %v1091 = vadd.f32 %v985, %v1029
          %v1092 = vadd.f32 %v986, %v1033
          %v1093 = vadd.f32 %v987, %v1037
          %v1094 = vadd.f32 %v988, %v1009
          %v1095 = vadd.f32 %v989, %v1013
          %v1096 = vadd.f32 %v990, %v1017
          %v1097 = vadd.f32 %v991, %v1021
          %v1098 = vadd.f32 %v992, %v1025
          %v1099 = vadd.f32 %v993, %v1029
          %v1100 = vadd.f32 %v994, %v1033
          %v1101 = vadd.f32 %v995, %v1037
          %v1102 = vadd.f32 %v996, %v1009
          %v1103 = vadd.f32 %v997, %v1013
          %v1104 = vadd.f32 %v998, %v1017
          %v1105 = vadd.f32 %v999, %v1021
          %v1106 = vadd.f32 %v1000, %v1025
          %v1107 = vadd.f32 %v1001, %v1029
          %v1108 = vadd.f32 %v1002, %v1033
          %v1109 = vadd.f32 %v1003, %v1037
          %v1110 = vpack.c.bf16 %v1054, %v1046
          %v1111 = vpack.c.bf16 %v1055, %v1047
          %v1112 = vpack.c.bf16 %v1056, %v1048
          %v1113 = vpack.c.bf16 %v1057, %v1049
          %v1114 = vpack.c.bf16 %v1058, %v1050
          %v1115 = vpack.c.bf16 %v1059, %v1051
          %v1116 = vpack.c.bf16 %v1060, %v1052
          %v1117 = vpack.c.bf16 %v1061, %v1053
          %v1118 = vpack.c.bf16 %v1070, %v1062
          %v1119 = vpack.c.bf16 %v1071, %v1063
          %v1120 = vpack.c.bf16 %v1072, %v1064
          %v1121 = vpack.c.bf16 %v1073, %v1065
          %v1122 = vpack.c.bf16 %v1074, %v1066
          %v1123 = vpack.c.bf16 %v1075, %v1067
          %v1124 = vpack.c.bf16 %v1076, %v1068
          %v1125 = vpack.c.bf16 %v1077, %v1069
          %v1126 = vpack.c.bf16 %v1086, %v1078
          %v1127 = vpack.c.bf16 %v1087, %v1079
          %v1128 = vpack.c.bf16 %v1088, %v1080
          %v1129 = vpack.c.bf16 %v1089, %v1081
          %v1130 = vpack.c.bf16 %v1090, %v1082
          %v1131 = vpack.c.bf16 %v1091, %v1083
          %v1132 = vpack.c.bf16 %v1092, %v1084
          %v1133 = vpack.c.bf16 %v1093, %v1085
          %v1134 = vpack.c.bf16 %v1102, %v1094
          %v1135 = vpack.c.bf16 %v1103, %v1095
          %v1136 = vpack.c.bf16 %v1104, %v1096
          %v1137 = vpack.c.bf16 %v1105, %v1097
          %v1138 = vpack.c.bf16 %v1106, %v1098
          %v1139 = vpack.c.bf16 %v1107, %v1099
          %v1140 = vpack.c.bf16 %v1108, %v1100
          %v1141 = vpack.c.bf16 %v1109, %v1101
          %v1174 = vunpack.c.l.b16 %v1110
          %v1175 = vunpack.c.l.b16 %v1111
          %v1176 = vunpack.c.l.b16 %v1112
          %v1177 = vunpack.c.l.b16 %v1113
          %v1178 = vunpack.c.l.b16 %v1114
          %v1179 = vunpack.c.l.b16 %v1115
          %v1180 = vunpack.c.l.b16 %v1116
          %v1181 = vunpack.c.l.b16 %v1117
          %v1182 = vunpack.c.h.b16 %v1110
          %v1183 = vunpack.c.h.b16 %v1111
          %v1184 = vunpack.c.h.b16 %v1112
          %v1185 = vunpack.c.h.b16 %v1113
          %v1186 = vunpack.c.h.b16 %v1114
          %v1187 = vunpack.c.h.b16 %v1115
          %v1188 = vunpack.c.h.b16 %v1116
          %v1189 = vunpack.c.h.b16 %v1117
          %v1190 = vunpack.c.l.b16 %v1118
          %v1191 = vunpack.c.l.b16 %v1119
          %v1192 = vunpack.c.l.b16 %v1120
          %v1193 = vunpack.c.l.b16 %v1121
          %v1194 = vunpack.c.l.b16 %v1122
          %v1195 = vunpack.c.l.b16 %v1123
          %v1196 = vunpack.c.l.b16 %v1124
          %v1197 = vunpack.c.l.b16 %v1125
          %v1198 = vunpack.c.h.b16 %v1118
          %v1199 = vunpack.c.h.b16 %v1119
          %v1200 = vunpack.c.h.b16 %v1120
          %v1201 = vunpack.c.h.b16 %v1121
          %v1202 = vunpack.c.h.b16 %v1122
          %v1203 = vunpack.c.h.b16 %v1123
          %v1204 = vunpack.c.h.b16 %v1124
          %v1205 = vunpack.c.h.b16 %v1125
          %v1206 = vunpack.c.l.b16 %v1126
          %v1207 = vunpack.c.l.b16 %v1127
          %v1208 = vunpack.c.l.b16 %v1128
          %v1209 = vunpack.c.l.b16 %v1129
          %v1210 = vunpack.c.l.b16 %v1130
          %v1211 = vunpack.c.l.b16 %v1131
          %v1212 = vunpack.c.l.b16 %v1132
          %v1213 = vunpack.c.l.b16 %v1133
          %v1214 = vunpack.c.h.b16 %v1126
          %v1215 = vunpack.c.h.b16 %v1127
          %v1216 = vunpack.c.h.b16 %v1128
          %v1217 = vunpack.c.h.b16 %v1129
          %v1218 = vunpack.c.h.b16 %v1130
          %v1219 = vunpack.c.h.b16 %v1131
          %v1220 = vunpack.c.h.b16 %v1132
          %v1221 = vunpack.c.h.b16 %v1133
          %v1222 = vunpack.c.l.b16 %v1134
          %v1223 = vunpack.c.l.b16 %v1135
          %v1224 = vunpack.c.l.b16 %v1136
          %v1225 = vunpack.c.l.b16 %v1137
          %v1226 = vunpack.c.l.b16 %v1138
          %v1227 = vunpack.c.l.b16 %v1139
          %v1228 = vunpack.c.l.b16 %v1140
          %v1229 = vunpack.c.l.b16 %v1141
          %v1230 = vunpack.c.h.b16 %v1134
          %v1231 = vunpack.c.h.b16 %v1135
          %v1232 = vunpack.c.h.b16 %v1136
          %v1233 = vunpack.c.h.b16 %v1137
          %v1234 = vunpack.c.h.b16 %v1138
          %v1235 = vunpack.c.h.b16 %v1139
          %v1236 = vunpack.c.h.b16 %v1140
          %v1237 = vunpack.c.h.b16 %v1141
          %v1238 = vpack.c.b16 %v1175, %v1174
          %v1239 = vpack.c.b16 %v1177, %v1176
          %v1240 = vpack.c.b16 %v1179, %v1178
          %v1241 = vpack.c.b16 %v1181, %v1180
          %v1242 = vpack.c.b16 %v1183, %v1182
          %v1243 = vpack.c.b16 %v1185, %v1184
          %v1244 = vpack.c.b16 %v1187, %v1186
          %v1245 = vpack.c.b16 %v1189, %v1188
          %v1246 = vpack.c.b16 %v1191, %v1190
          %v1247 = vpack.c.b16 %v1193, %v1192
          %v1248 = vpack.c.b16 %v1195, %v1194
          %v1249 = vpack.c.b16 %v1197, %v1196
          %v1250 = vpack.c.b16 %v1199, %v1198
          %v1251 = vpack.c.b16 %v1201, %v1200
          %v1252 = vpack.c.b16 %v1203, %v1202
          %v1253 = vpack.c.b16 %v1205, %v1204
          %v1254 = vpack.c.b16 %v1207, %v1206
          %v1255 = vpack.c.b16 %v1209, %v1208
          %v1256 = vpack.c.b16 %v1211, %v1210
          %v1257 = vpack.c.b16 %v1213, %v1212
          %v1258 = vpack.c.b16 %v1215, %v1214
          %v1259 = vpack.c.b16 %v1217, %v1216
          %v1260 = vpack.c.b16 %v1219, %v1218
          %v1261 = vpack.c.b16 %v1221, %v1220
          %v1262 = vpack.c.b16 %v1223, %v1222
          %v1263 = vpack.c.b16 %v1225, %v1224
          %v1264 = vpack.c.b16 %v1227, %v1226
          %v1265 = vpack.c.b16 %v1229, %v1228
          %v1266 = vpack.c.b16 %v1231, %v1230
          %v1267 = vpack.c.b16 %v1233, %v1232
          %v1268 = vpack.c.b16 %v1235, %v1234
          %v1269 = vpack.c.b16 %v1237, %v1236
          %1302 = vst [vmem:[%s257] sm:$0xff] %v1238
          %1303 = vst [vmem:[%s257 + $0x8] sm:$0xff] %v1239
          %1304 = vst [vmem:[%s257 + $0x10] sm:$0xff] %v1240
          %1305 = vst [vmem:[%s257 + $0x18] sm:$0xff] %v1241
          %1306 = vst [vmem:[%s257 + $0x20] sm:$0xff] %v1242
          %1307 = vst [vmem:[%s257 + $0x28] sm:$0xff] %v1243
          %1308 = vst [vmem:[%s257 + $0x30] sm:$0xff] %v1244
          %1309 = vst [vmem:[%s257 + $0x38] sm:$0xff] %v1245
          %1310 = vst [vmem:[%s257 + $0x40] sm:$0xff] %v1246
          %1311 = vst [vmem:[%s257 + $0x48] sm:$0xff] %v1247
          %1312 = vst [vmem:[%s257 + $0x50] sm:$0xff] %v1248
          %1313 = vst [vmem:[%s257 + $0x58] sm:$0xff] %v1249
          %1314 = vst [vmem:[%s257 + $0x60] sm:$0xff] %v1250
          %1315 = vst [vmem:[%s257 + $0x68] sm:$0xff] %v1251
          %1316 = vst [vmem:[%s257 + $0x70] sm:$0xff] %v1252
          %1317 = vst [vmem:[%s257 + $0x78] sm:$0xff] %v1253
          %1318 = vst [vmem:[%s257 + $0x80] sm:$0xff] %v1254
          %1319 = vst [vmem:[%s257 + $0x88] sm:$0xff] %v1255
          %1320 = vst [vmem:[%s257 + $0x90] sm:$0xff] %v1256
          %1321 = vst [vmem:[%s257 + $0x98] sm:$0xff] %v1257
          %1322 = vst [vmem:[%s257 + $0xa0] sm:$0xff] %v1258
          %1323 = vst [vmem:[%s257 + $0xa8] sm:$0xff] %v1259
          %1324 = vst [vmem:[%s257 + $0xb0] sm:$0xff] %v1260
          %1325 = vst [vmem:[%s257 + $0xb8] sm:$0xff] %v1261
          %1326 = vst [vmem:[%s257 + $0xc0] sm:$0xff] %v1262
          %1327 = vst [vmem:[%s257 + $0xc8] sm:$0xff] %v1263
          %1328 = vst [vmem:[%s257 + $0xd0] sm:$0xff] %v1264
          %1329 = vst [vmem:[%s257 + $0xd8] sm:$0xff] %v1265
          %1330 = vst [vmem:[%s257 + $0xe0] sm:$0xff] %v1266
          %1331 = vst [vmem:[%s257 + $0xe8] sm:$0xff] %v1267
          %1332 = vst [vmem:[%s257 + $0xf0] sm:$0xff] %v1268
          %1333 = vst [vmem:[%s257 + $0xf8] sm:$0xff] %v1269
        $region44: #{tpu_custom_call.1} parent=31 // pred_fallthru
          _
        %s1334 = sand.u32 %s131, 1
        %s1335 = scalar_lea.sflag [#allocation5], %s1334
        %s1336 = sand.u32 %s131, 1
        %s1337 = smul.addr %s1336, 256
        %s1338 = scalar_lea.vmem [#allocation6], %s1337
        // Predicated region
        $region45: #{tpu_custom_call.1} parent=31 // pred_check
          %p1339 = pneg %p141
        $region46: #{tpu_custom_call.1} parent=31 // pred_check_branch
          %1341 = sbr.rel (%p1339) target = $region48
        $region47: #{tpu_custom_call.1} parent=31 // pred_region
          %s1342 = smul.u32 8, %s25
          %s1343 = smul.u32 8, %s26
          %s1345 = ssub.s32 4096, 4096
          %1346 = vsyncadd %s1335, %s1345
          %s1347 = smul.addr %s1342, 16
          %s1348 = sadd.s32 %s1343, %s1347
          %s1349 = smul.addr %s1348, 64
          %s1350 = scalar_lea.hbm %s3, %s1349
          %s1351 = sshll.u32 %s1338, 4
          %s1352 = int_to_ptr.vmem [resolvable:$true] %s1351
          %1357 = dma.vmem_to_hbm [thread:$0]  %s1352, 4096, %s1350, %s1335, 512, 1024, 32
        $region48: #{tpu_custom_call.1} parent=31 // pred_fallthru
          _
      $region32: #{tpu_custom_call.1} parent=5 // pred_fallthru
        _
      %p1358 = scmp.le.s32.totalorder 2, %s15
      // Predicated region
      $region49: #{tpu_custom_call.1} parent=5 // pred_check
        %p1359 = pneg %p1358
      $region50: #{tpu_custom_call.1} parent=5 // pred_check_branch
        %1361 = sbr.rel (%p1359) target = $region52
      $region51: #{tpu_custom_call.1} parent=5 // pred_region
        %s1362 = ssub.s32 %s15, 2
        // Predicated region
        $region53: #{tpu_custom_call.1} parent=51 // pred_check
          %p1363 = pneg %p147
        $region54: #{tpu_custom_call.1} parent=51 // pred_check_branch
          %1365 = sbr.rel (%p1363) target = $region56
        $region55: #{tpu_custom_call.1} parent=51 // pred_region
          %s1366 = sand.u32 %s132, 1
          %s1367 = scalar_lea.sflag [#allocation5], %s1366
          %s1368 = sand.u32 %s132, 1
          %s1369 = smul.addr %s1368, 256
          %s1370 = scalar_lea.vmem [#allocation6], %s1369
          %1371 = dma.done %s1367, 4096
        $region56: #{tpu_custom_call.1} parent=51 // pred_fallthru
          _
      $region52: #{tpu_custom_call.1} parent=5 // pred_fallthru
        _
    $region6: #{tpu_custom_call.1} parent=1 // loop_footer
      %s19 = sadd.s32 1, %s15
    $region7: #{tpu_custom_call.1} parent=1 // loop_footer_branch
      %14 = sbr.rel target = $region3
    $region8: #{tpu_custom_call.1} parent=1 // loop_exit
      _
    %1372 = vsyncpa [#allocation4], 1
    %s1373 = scalar_lea.sflag [#allocation4], 1
    %1374 = vsyncpa %s1373, 1
    %1375 = vsyncpa [#allocation5], 1
    %s1376 = scalar_lea.sflag [#allocation5], 1
    %1377 = vsyncpa %s1376, 1

</llo_original>
